<compile_context>
chip_gen: v6e
topology: v6e:2x2x1
jax: 0.10.0
libtpu: 0.0.40
codegen_flags: <defaults>
</compile_context>

<pallas_src>
import jax
import jax.numpy as jnp
from jax import lax
from jax.experimental import pallas as pl
from jax.experimental.pallas import tpu as pltpu

# ---------------------------------------------------------------------------
# Static network geometry (Atari NatureCNN: input 4 x 84 x 84).
# ---------------------------------------------------------------------------
H0, W0, C0 = 84, 84, 4            # network input (NCHW, channels = 4)
K1, S1, C1 = 8, 4, 32             # conv1: 8x8 stride 4 -> 20x20x32
K2, S2, C2 = 4, 2, 64             # conv2: 4x4 stride 2 -> 9x9x64
K3, S3, C3 = 3, 1, 64             # conv3: 3x3 stride 1 -> 7x7x64
H1 = W1 = (H0 - K1) // S1 + 1     # 20
H2 = W2 = (H1 - K2) // S2 + 1     # 9
H3 = W3 = (H2 - K3) // S3 + 1     # 7
GROUP = S1                        # conv1 input lane grouping: lane = (w % 4)*C0 + c
WG = W0 // GROUP                  # 21 w-groups per image row


# ---------------------------------------------------------------------------
# Fused kernel: whole forward for one image per grid step.
# Refs: x, (w, b) x 4 layers, output, then VMEM scratch activations.
# ---------------------------------------------------------------------------
def _fused_cnn_kernel(x_ref, w1_ref, b1_ref, w2_ref, b2_ref, w3_ref, b3_ref,
                      wfc_ref, bfc_ref, o_ref, act1, act2, act3):
    cdt = jnp.bfloat16  # MXU input dtype; accumulation stays f32

    # ---- conv1: (84, 84, 4) --8x8 / s4--> (20, 20, 32) ---------------------
    # Input rows are grouped as (h*21 + w//4, (w % 4)*4 + c), so every piece is
    # a contiguous row load; the lane concat yields K = kh*kw*C0 = 256.
    def conv1_row(ho, carry):
        pieces = []
        for ki in range(K1):
            row = x_ref[0, pl.ds((S1 * ho + ki) * WG, WG), :]     # (21, 16)
            for a in range(K1 // GROUP):                          # kj = 4*a + (w % 4)
                pieces.append(row[a:a + W1, :])                   # (20, 16)
        lhs = jnp.concatenate(pieces, axis=1).astype(cdt)         # (20, 256)
        acc = jnp.dot(lhs, w1_ref[...], preferred_element_type=jnp.float32)
        act1[pl.ds(ho * W1, W1), :] = jnp.maximum(acc + b1_ref[...], 0.0)
        return carry
    lax.fori_loop(0, H1, conv1_row, 0)

    # ---- conv2: (20, 20, 32) --4x4 / s2--> (9, 9, 64) ----------------------
    # act1 is stored (h*20 + w, c); the stride-2 window read uses strided pl.ds.
    def conv2_row(ho, carry):
        pieces = []
        for ki in range(K2):
            base = (S2 * ho + ki) * W1
            for kj in range(K2):
                pieces.append(act1[pl.ds(base + kj, W2, stride=S2), :])  # (9, 32)
        lhs = jnp.concatenate(pieces, axis=1).astype(cdt)         # (9, 512)
        acc = jnp.dot(lhs, w2_ref[...], preferred_element_type=jnp.float32)
        act2[pl.ds(ho * W2, W2), :] = jnp.maximum(acc + b2_ref[...], 0.0)
        return carry
    lax.fori_loop(0, H2, conv2_row, 0)

    # ---- conv3: (9, 9, 64) --3x3 / s1--> (7, 7, 64) ------------------------
    def conv3_row(ho, carry):
        pieces = []
        for ki in range(K3):
            row = act2[pl.ds((ho + ki) * W2, W2), :]              # (9, 64)
            for kj in range(K3):
                pieces.append(row[kj:kj + W3, :])                 # (7, 64)
        lhs = jnp.concatenate(pieces, axis=1).astype(cdt)         # (7, 576)
        acc = jnp.dot(lhs, w3_ref[...], preferred_element_type=jnp.float32)
        act3[pl.ds(ho * W3, W3), :] = jnp.maximum(acc + b3_ref[...], 0.0)
        return carry
    lax.fori_loop(0, H3, conv3_row, 0)

    # ---- fc: flatten in (h, w, c) order (3136) -> hidden, ReLU -------------
    # Accumulate 49 position-chunks of K = 64 so no tiled-dim reshape is needed.
    def fc_step(p, acc):
        a = act3[pl.ds(p, 1), :].astype(cdt)                      # (1, 64)
        w = wfc_ref[pl.ds(pl.multiple_of(p * C3, C3), C3), :]     # (64, hidden)
        return acc + jnp.dot(a, w, preferred_element_type=jnp.float32)
    fc = lax.fori_loop(0, H3 * W3, fc_step, jnp.zeros_like(bfc_ref[...]))
    o_ref[0] = jnp.maximum(fc + bfc_ref[...], 0.0).astype(o_ref.dtype)


# ---------------------------------------------------------------------------
# Parameters: canonical PyTorch layout + one-time kernel re-layout.
# ---------------------------------------------------------------------------
def init_params(hidden_dim=128, seed=0):
    """Canonical PyTorch-layout parameters (OIHW conv weights, (out, in) fc)."""
    ks = jax.random.split(jax.random.PRNGKey(seed), 8)

    def conv_w(key, oc, ic, k):
        fan_in = ic * k * k
        return jax.random.normal(key, (oc, ic, k, k), jnp.float32) * jnp.sqrt(2.0 / fan_in)

    return {
        "c1_w": conv_w(ks[0], C1, C0, K1),
        "c1_b": 0.1 * jax.random.normal(ks[1], (C1,), jnp.float32),
        "c2_w": conv_w(ks[2], C2, C1, K2),
        "c2_b": 0.1 * jax.random.normal(ks[3], (C2,), jnp.float32),
        "c3_w": conv_w(ks[4], C3, C2, K3),
        "c3_b": 0.1 * jax.random.normal(ks[5], (C3,), jnp.float32),
        "fc_w": jax.random.normal(ks[6], (hidden_dim, C3 * H3 * W3), jnp.float32)
                * jnp.sqrt(2.0 / (C3 * H3 * W3)),
        "fc_b": 0.1 * jax.random.normal(ks[7], (hidden_dim,), jnp.float32),
    }


def prepare_params(params):
    """One-time re-layout so the forward does no weight transposes:
    conv OIHW -> (kh*kw*ic, oc) bf16 (row order ki, kj, c), fc -> (h*w*c, hidden)
    bf16 permuted to the kernel's flatten order, biases as (1, n) f32 rows."""
    hidden = params["fc_w"].shape[0]

    def conv_mat(w):
        oc, ic, kh, kw = w.shape
        return w.transpose(2, 3, 1, 0).reshape(kh * kw * ic, oc).astype(jnp.bfloat16)

    fc_mat = (params["fc_w"].reshape(hidden, C3, H3, W3)
              .transpose(2, 3, 1, 0).reshape(H3 * W3 * C3, hidden).astype(jnp.bfloat16))
    return {
        "c1_w": conv_mat(params["c1_w"]),
        "c1_b": params["c1_b"].reshape(1, -1).astype(jnp.float32),
        "c2_w": conv_mat(params["c2_w"]),
        "c2_b": params["c2_b"].reshape(1, -1).astype(jnp.float32),
        "c3_w": conv_mat(params["c3_w"]),
        "c3_b": params["c3_b"].reshape(1, -1).astype(jnp.float32),
        "fc_w": fc_mat,
        "fc_b": params["fc_b"].reshape(1, -1).astype(jnp.float32),
    }


# ---------------------------------------------------------------------------
# Forward pass (single fused pallas_call, grid over batch).
# ---------------------------------------------------------------------------
def cnn_encoder_forward(prep, x):
    """x: (B, 4, 84, 84) float32 NCHW (PyTorch convention) -> (B, hidden)."""
    B = x.shape[0]
    hidden = prep["fc_b"].shape[-1]
    # Single layout-plumbing step on the raw input: NCHW -> channel-minor rows
    # grouped by the conv1 stride: row = h*21 + w//4, lane = (w % 4)*4 + c.
    xg = x.transpose(0, 2, 3, 1).reshape(B, H0 * WG, GROUP * C0)

    out = pl.pallas_call(
        _fused_cnn_kernel,
        out_shape=jax.ShapeDtypeStruct((B, 1, hidden), jnp.float32),
        grid_spec=pltpu.PrefetchScalarGridSpec(
            num_scalar_prefetch=0,
            grid=(B,),
            in_specs=[
                pl.BlockSpec((1, H0 * WG, GROUP * C0), lambda b: (b, 0, 0)),
                pl.BlockSpec((K1 * K1 * C0, C1), lambda b: (0, 0)),
                pl.BlockSpec((1, C1), lambda b: (0, 0)),
                pl.BlockSpec((K2 * K2 * C1, C2), lambda b: (0, 0)),
                pl.BlockSpec((1, C2), lambda b: (0, 0)),
                pl.BlockSpec((K3 * K3 * C2, C3), lambda b: (0, 0)),
                pl.BlockSpec((1, C3), lambda b: (0, 0)),
                pl.BlockSpec((H3 * W3 * C3, hidden), lambda b: (0, 0)),
                pl.BlockSpec((1, hidden), lambda b: (0, 0)),
            ],
            out_specs=pl.BlockSpec((1, 1, hidden), lambda b: (b, 0, 0)),
            scratch_shapes=[
                pltpu.VMEM((H1 * W1, C1), jnp.float32),   # conv1 activations
                pltpu.VMEM((H2 * W2, C2), jnp.float32),   # conv2 activations
                pltpu.VMEM((H3 * W3, C3), jnp.float32),   # conv3 activations
            ],
        ),
        compiler_params=pltpu.CompilerParams(
            dimension_semantics=("parallel",)),
    )(xg, prep["c1_w"], prep["c1_b"], prep["c2_w"], prep["c2_b"],
      prep["c3_w"], prep["c3_b"], prep["fc_w"], prep["fc_b"])
    return out.reshape(B, hidden)


# ---------------------------------------------------------------------------
# Pure-JAX f32 reference (PyTorch semantics) for the correctness check.
# ---------------------------------------------------------------------------
def _ref_forward(params, x):
    def conv(h, w, b, s):
        y = lax.conv_general_dilated(
            h, w, window_strides=(s, s), padding="VALID",
            dimension_numbers=("NCHW", "OIHW", "NCHW"))
        return jax.nn.relu(y + b[None, :, None, None])

    h = conv(x, params["c1_w"], params["c1_b"], S1)
    h = conv(h, params["c2_w"], params["c2_b"], S2)
    h = conv(h, params["c3_w"], params["c3_b"], S3)
    flat = h.reshape(h.shape[0], -1)                     # PyTorch (c, h, w) flatten
    return jax.nn.relu(flat @ params["fc_w"].T + params["fc_b"])


if __name__ == "__main__":
    hidden_dim = 128   # lane-dense hidden size (module default 512 also works: /128)
    params = init_params(hidden_dim=hidden_dim, seed=0)
    prep = prepare_params(params)

    # Flatten -> Linear(64*7*7) pins the spatial size to 84x84 (Atari frames).
    x = jax.random.normal(jax.random.PRNGKey(0), (2, 4, 84, 84), jnp.float32)

    fwd = jax.jit(cnn_encoder_forward)
    out = jax.block_until_ready(fwd(prep, x))
    assert out.shape == (2, hidden_dim), out.shape

    ref = _ref_forward(params, x)
    max_err = float(jnp.max(jnp.abs(out - ref)))
    assert jnp.allclose(out, ref, rtol=2e-2, atol=2e-2), max_err

    print("KERNEL_OK")
</pallas_src>

<mosaic_0001>
module attributes {stable_mosaic.version = 11 : i64} {
  func.func @_fused_cnn_kernel(%arg0: i32, %arg1: memref<1x1764x16xf32, #tpu.memory_space<vmem>>, %arg2: memref<256x32xbf16, #tpu.memory_space<vmem>>, %arg3: memref<1x32xf32, #tpu.memory_space<vmem>>, %arg4: memref<512x64xbf16, #tpu.memory_space<vmem>>, %arg5: memref<1x64xf32, #tpu.memory_space<vmem>>, %arg6: memref<576x64xbf16, #tpu.memory_space<vmem>>, %arg7: memref<1x64xf32, #tpu.memory_space<vmem>>, %arg8: memref<3136x128xbf16, #tpu.memory_space<vmem>>, %arg9: memref<1x128xf32, #tpu.memory_space<vmem>>, %arg10: memref<1x1x128xf32, #tpu.memory_space<vmem>>, %arg11: memref<400x32xf32, #tpu.memory_space<vmem>>, %arg12: memref<81x64xf32, #tpu.memory_space<vmem>>, %arg13: memref<49x64xf32, #tpu.memory_space<vmem>>) attributes {dimension_semantics = [#tpu.dimension_semantics<parallel>], iteration_bounds = array<i64: 2>, scalar_prefetch = 0 : i64, scratch_operands = 3 : i64, tpu.core_type = #tpu.core_type<tc>, window_params = [{transform_indices = @transform_0, window_bounds = array<i64: 1, 1764, 16>}, {pipeline_mode = #tpu.pipeline_mode<synchronous>, transform_indices = @transform_1, window_bounds = array<i64: 256, 32>}, {pipeline_mode = #tpu.pipeline_mode<synchronous>, transform_indices = @transform_2, window_bounds = array<i64: 1, 32>}, {pipeline_mode = #tpu.pipeline_mode<synchronous>, transform_indices = @transform_3, window_bounds = array<i64: 512, 64>}, {pipeline_mode = #tpu.pipeline_mode<synchronous>, transform_indices = @transform_4, window_bounds = array<i64: 1, 64>}, {pipeline_mode = #tpu.pipeline_mode<synchronous>, transform_indices = @transform_5, window_bounds = array<i64: 576, 64>}, {pipeline_mode = #tpu.pipeline_mode<synchronous>, transform_indices = @transform_6, window_bounds = array<i64: 1, 64>}, {pipeline_mode = #tpu.pipeline_mode<synchronous>, transform_indices = @transform_7, window_bounds = array<i64: 3136, 128>}, {pipeline_mode = #tpu.pipeline_mode<synchronous>, transform_indices = @transform_8, window_bounds = array<i64: 1, 128>}, {transform_indices = @transform_9, window_bounds = array<i64: 1, 1, 128>}]} {
    %c0_i32 = arith.constant 0 : i32
    %c20_i32 = arith.constant 20 : i32
    %0 = arith.addi %c0_i32, %c20_i32 : i32
    %c1_i32 = arith.constant 1 : i32
    scf.for %arg14 = %c0_i32 to %0 step %c1_i32  : i32 {
      %c4_i32 = arith.constant 4 : i32
      %13 = arith.muli %c4_i32, %arg14 : i32
      %c0_i32_15 = arith.constant 0 : i32
      %14 = arith.addi %13, %c0_i32_15 : i32
      %c21_i32 = arith.constant 21 : i32
      %15 = arith.muli %14, %c21_i32 : i32
      %c0_16 = arith.constant 0 : index
      %16 = arith.index_cast %15 : i32 to index
      %c0_17 = arith.constant 0 : index
      %17 = vector.load %arg1[%c0_16, %16, %c0_17] : memref<1x1764x16xf32, #tpu.memory_space<vmem>>, vector<1x21x16xf32>
      %18 = vector.shape_cast %17 : vector<1x21x16xf32> to vector<21x16xf32>
      %19 = vector.extract_strided_slice %18 {offsets = [0, 0], sizes = [20, 16], strides = [1, 1]} : vector<21x16xf32> to vector<20x16xf32>
      %20 = vector.extract_strided_slice %18 {offsets = [1, 0], sizes = [20, 16], strides = [1, 1]} : vector<21x16xf32> to vector<20x16xf32>
      %c4_i32_18 = arith.constant 4 : i32
      %21 = arith.muli %c4_i32_18, %arg14 : i32
      %c1_i32_19 = arith.constant 1 : i32
      %22 = arith.addi %21, %c1_i32_19 : i32
      %c21_i32_20 = arith.constant 21 : i32
      %23 = arith.muli %22, %c21_i32_20 : i32
      %c0_21 = arith.constant 0 : index
      %24 = arith.index_cast %23 : i32 to index
      %c0_22 = arith.constant 0 : index
      %25 = vector.load %arg1[%c0_21, %24, %c0_22] : memref<1x1764x16xf32, #tpu.memory_space<vmem>>, vector<1x21x16xf32>
      %26 = vector.shape_cast %25 : vector<1x21x16xf32> to vector<21x16xf32>
      %27 = vector.extract_strided_slice %26 {offsets = [0, 0], sizes = [20, 16], strides = [1, 1]} : vector<21x16xf32> to vector<20x16xf32>
      %28 = vector.extract_strided_slice %26 {offsets = [1, 0], sizes = [20, 16], strides = [1, 1]} : vector<21x16xf32> to vector<20x16xf32>
      %c4_i32_23 = arith.constant 4 : i32
      %29 = arith.muli %c4_i32_23, %arg14 : i32
      %c2_i32 = arith.constant 2 : i32
      %30 = arith.addi %29, %c2_i32 : i32
      %c21_i32_24 = arith.constant 21 : i32
      %31 = arith.muli %30, %c21_i32_24 : i32
      %c0_25 = arith.constant 0 : index
      %32 = arith.index_cast %31 : i32 to index
      %c0_26 = arith.constant 0 : index
      %33 = vector.load %arg1[%c0_25, %32, %c0_26] : memref<1x1764x16xf32, #tpu.memory_space<vmem>>, vector<1x21x16xf32>
      %34 = vector.shape_cast %33 : vector<1x21x16xf32> to vector<21x16xf32>
      %35 = vector.extract_strided_slice %34 {offsets = [0, 0], sizes = [20, 16], strides = [1, 1]} : vector<21x16xf32> to vector<20x16xf32>
      %36 = vector.extract_strided_slice %34 {offsets = [1, 0], sizes = [20, 16], strides = [1, 1]} : vector<21x16xf32> to vector<20x16xf32>
      %c4_i32_27 = arith.constant 4 : i32
      %37 = arith.muli %c4_i32_27, %arg14 : i32
      %c3_i32 = arith.constant 3 : i32
      %38 = arith.addi %37, %c3_i32 : i32
      %c21_i32_28 = arith.constant 21 : i32
      %39 = arith.muli %38, %c21_i32_28 : i32
      %c0_29 = arith.constant 0 : index
      %40 = arith.index_cast %39 : i32 to index
      %c0_30 = arith.constant 0 : index
      %41 = vector.load %arg1[%c0_29, %40, %c0_30] : memref<1x1764x16xf32, #tpu.memory_space<vmem>>, vector<1x21x16xf32>
      %42 = vector.shape_cast %41 : vector<1x21x16xf32> to vector<21x16xf32>
      %43 = vector.extract_strided_slice %42 {offsets = [0, 0], sizes = [20, 16], strides = [1, 1]} : vector<21x16xf32> to vector<20x16xf32>
      %44 = vector.extract_strided_slice %42 {offsets = [1, 0], sizes = [20, 16], strides = [1, 1]} : vector<21x16xf32> to vector<20x16xf32>
      %c4_i32_31 = arith.constant 4 : i32
      %45 = arith.muli %c4_i32_31, %arg14 : i32
      %c4_i32_32 = arith.constant 4 : i32
      %46 = arith.addi %45, %c4_i32_32 : i32
      %c21_i32_33 = arith.constant 21 : i32
      %47 = arith.muli %46, %c21_i32_33 : i32
      %c0_34 = arith.constant 0 : index
      %48 = arith.index_cast %47 : i32 to index
      %c0_35 = arith.constant 0 : index
      %49 = vector.load %arg1[%c0_34, %48, %c0_35] : memref<1x1764x16xf32, #tpu.memory_space<vmem>>, vector<1x21x16xf32>
      %50 = vector.shape_cast %49 : vector<1x21x16xf32> to vector<21x16xf32>
      %51 = vector.extract_strided_slice %50 {offsets = [0, 0], sizes = [20, 16], strides = [1, 1]} : vector<21x16xf32> to vector<20x16xf32>
      %52 = vector.extract_strided_slice %50 {offsets = [1, 0], sizes = [20, 16], strides = [1, 1]} : vector<21x16xf32> to vector<20x16xf32>
      %c4_i32_36 = arith.constant 4 : i32
      %53 = arith.muli %c4_i32_36, %arg14 : i32
      %c5_i32 = arith.constant 5 : i32
      %54 = arith.addi %53, %c5_i32 : i32
      %c21_i32_37 = arith.constant 21 : i32
      %55 = arith.muli %54, %c21_i32_37 : i32
      %c0_38 = arith.constant 0 : index
      %56 = arith.index_cast %55 : i32 to index
      %c0_39 = arith.constant 0 : index
      %57 = vector.load %arg1[%c0_38, %56, %c0_39] : memref<1x1764x16xf32, #tpu.memory_space<vmem>>, vector<1x21x16xf32>
      %58 = vector.shape_cast %57 : vector<1x21x16xf32> to vector<21x16xf32>
      %59 = vector.extract_strided_slice %58 {offsets = [0, 0], sizes = [20, 16], strides = [1, 1]} : vector<21x16xf32> to vector<20x16xf32>
      %60 = vector.extract_strided_slice %58 {offsets = [1, 0], sizes = [20, 16], strides = [1, 1]} : vector<21x16xf32> to vector<20x16xf32>
      %c4_i32_40 = arith.constant 4 : i32
      %61 = arith.muli %c4_i32_40, %arg14 : i32
      %c6_i32 = arith.constant 6 : i32
      %62 = arith.addi %61, %c6_i32 : i32
      %c21_i32_41 = arith.constant 21 : i32
      %63 = arith.muli %62, %c21_i32_41 : i32
      %c0_42 = arith.constant 0 : index
      %64 = arith.index_cast %63 : i32 to index
      %c0_43 = arith.constant 0 : index
      %65 = vector.load %arg1[%c0_42, %64, %c0_43] : memref<1x1764x16xf32, #tpu.memory_space<vmem>>, vector<1x21x16xf32>
      %66 = vector.shape_cast %65 : vector<1x21x16xf32> to vector<21x16xf32>
      %67 = vector.extract_strided_slice %66 {offsets = [0, 0], sizes = [20, 16], strides = [1, 1]} : vector<21x16xf32> to vector<20x16xf32>
      %68 = vector.extract_strided_slice %66 {offsets = [1, 0], sizes = [20, 16], strides = [1, 1]} : vector<21x16xf32> to vector<20x16xf32>
      %c4_i32_44 = arith.constant 4 : i32
      %69 = arith.muli %c4_i32_44, %arg14 : i32
      %c7_i32_45 = arith.constant 7 : i32
      %70 = arith.addi %69, %c7_i32_45 : i32
      %c21_i32_46 = arith.constant 21 : i32
      %71 = arith.muli %70, %c21_i32_46 : i32
      %c0_47 = arith.constant 0 : index
      %72 = arith.index_cast %71 : i32 to index
      %c0_48 = arith.constant 0 : index
      %73 = vector.load %arg1[%c0_47, %72, %c0_48] : memref<1x1764x16xf32, #tpu.memory_space<vmem>>, vector<1x21x16xf32>
      %74 = vector.shape_cast %73 : vector<1x21x16xf32> to vector<21x16xf32>
      %75 = vector.extract_strided_slice %74 {offsets = [0, 0], sizes = [20, 16], strides = [1, 1]} : vector<21x16xf32> to vector<20x16xf32>
      %76 = vector.extract_strided_slice %74 {offsets = [1, 0], sizes = [20, 16], strides = [1, 1]} : vector<21x16xf32> to vector<20x16xf32>
      %77 = tpu.concatenate %19, %20, %27, %28, %35, %36, %43, %44, %51, %52, %59, %60, %67, %68, %75, %76 in 1 : vector<20x16xf32>, vector<20x16xf32>, vector<20x16xf32>, vector<20x16xf32>, vector<20x16xf32>, vector<20x16xf32>, vector<20x16xf32>, vector<20x16xf32>, vector<20x16xf32>, vector<20x16xf32>, vector<20x16xf32>, vector<20x16xf32>, vector<20x16xf32>, vector<20x16xf32>, vector<20x16xf32>, vector<20x16xf32> -> vector<20x256xf32>
      %78 = arith.truncf %77 : vector<20x256xf32> to vector<20x256xbf16>
      %c0_49 = arith.constant 0 : index
      %c0_50 = arith.constant 0 : index
      %79 = vector.load %arg2[%c0_49, %c0_50] : memref<256x32xbf16, #tpu.memory_space<vmem>>, vector<256x32xbf16>
      %cst_51 = arith.constant dense<0.000000e+00> : vector<20x32xf32>
      %80 = tpu.matmul %78, %79, %cst_51 {dimension_numbers = #tpu.dot_dimension_numbers<[1], [0], [0], [1], [0, 0, 1, 1], [], []>} : vector<20x256xbf16>, vector<256x32xbf16>, vector<20x32xf32> -> vector<20x32xf32>
      %c0_52 = arith.constant 0 : index
      %c0_53 = arith.constant 0 : index
      %81 = vector.load %arg3[%c0_52, %c0_53] : memref<1x32xf32, #tpu.memory_space<vmem>>, vector<1x32xf32>
      %82 = vector.broadcast %81 : vector<1x32xf32> to vector<20x32xf32>
      %83 = arith.addf %80, %82 : vector<20x32xf32>
      %cst_54 = arith.constant 0.000000e+00 : f32
      %84 = vector.broadcast %cst_54 : f32 to vector<20x32xf32>
      %85 = arith.maximumf %83, %84 : vector<20x32xf32>
      %c20_i32_55 = arith.constant 20 : i32
      %86 = arith.muli %arg14, %c20_i32_55 : i32
      %87 = arith.index_cast %86 : i32 to index
      %c0_56 = arith.constant 0 : index
      %88 = vector.load %arg11[%87, %c0_56] : memref<400x32xf32, #tpu.memory_space<vmem>>, vector<20x32xf32>
      tpu.vector_store %arg11[%87, %c0_56], %85 {strides = array<i32>} : memref<400x32xf32, #tpu.memory_space<vmem>>, vector<20x32xf32>,
    }
    %c20_i32_0 = arith.constant 20 : i32
    %c0_i32_1 = arith.constant 0 : i32
    %c9_i32 = arith.constant 9 : i32
    %1 = arith.addi %c0_i32_1, %c9_i32 : i32
    %c1_i32_2 = arith.constant 1 : i32
    scf.for %arg14 = %c0_i32_1 to %1 step %c1_i32_2  : i32 {
      %c2_i32 = arith.constant 2 : i32
      %13 = arith.muli %c2_i32, %arg14 : i32
      %c0_i32_15 = arith.constant 0 : i32
      %14 = arith.addi %13, %c0_i32_15 : i32
      %c20_i32_16 = arith.constant 20 : i32
      %15 = arith.muli %14, %c20_i32_16 : i32
      %c0_i32_17 = arith.constant 0 : i32
      %16 = arith.addi %15, %c0_i32_17 : i32
      %17 = arith.index_cast %16 : i32 to index
      %c0_18 = arith.constant 0 : index
      %18 = tpu.strided_load %arg11[%17, %c0_18] {strides = array<i32: 2, 1>} : memref<400x32xf32, #tpu.memory_space<vmem>>, vector<9x32xf32>
      %c1_i32_19 = arith.constant 1 : i32
      %19 = arith.addi %15, %c1_i32_19 : i32
      %20 = arith.index_cast %19 : i32 to index
      %c0_20 = arith.constant 0 : index
      %21 = tpu.strided_load %arg11[%20, %c0_20] {strides = array<i32: 2, 1>} : memref<400x32xf32, #tpu.memory_space<vmem>>, vector<9x32xf32>
      %c2_i32_21 = arith.constant 2 : i32
      %22 = arith.addi %15, %c2_i32_21 : i32
      %23 = arith.index_cast %22 : i32 to index
      %c0_22 = arith.constant 0 : index
      %24 = tpu.strided_load %arg11[%23, %c0_22] {strides = array<i32: 2, 1>} : memref<400x32xf32, #tpu.memory_space<vmem>>, vector<9x32xf32>
      %c3_i32 = arith.constant 3 : i32
      %25 = arith.addi %15, %c3_i32 : i32
      %26 = arith.index_cast %25 : i32 to index
      %c0_23 = arith.constant 0 : index
      %27 = tpu.strided_load %arg11[%26, %c0_23] {strides = array<i32: 2, 1>} : memref<400x32xf32, #tpu.memory_space<vmem>>, vector<9x32xf32>
      %c2_i32_24 = arith.constant 2 : i32
      %28 = arith.muli %c2_i32_24, %arg14 : i32
      %c1_i32_25 = arith.constant 1 : i32
      %29 = arith.addi %28, %c1_i32_25 : i32
      %c20_i32_26 = arith.constant 20 : i32
      %30 = arith.muli %29, %c20_i32_26 : i32
      %c0_i32_27 = arith.constant 0 : i32
      %31 = arith.addi %30, %c0_i32_27 : i32
      %32 = arith.index_cast %31 : i32 to index
      %c0_28 = arith.constant 0 : index
      %33 = tpu.strided_load %arg11[%32, %c0_28] {strides = array<i32: 2, 1>} : memref<400x32xf32, #tpu.memory_space<vmem>>, vector<9x32xf32>
      %c1_i32_29 = arith.constant 1 : i32
      %34 = arith.addi %30, %c1_i32_29 : i32
      %35 = arith.index_cast %34 : i32 to index
      %c0_30 = arith.constant 0 : index
      %36 = tpu.strided_load %arg11[%35, %c0_30] {strides = array<i32: 2, 1>} : memref<400x32xf32, #tpu.memory_space<vmem>>, vector<9x32xf32>
      %c2_i32_31 = arith.constant 2 : i32
      %37 = arith.addi %30, %c2_i32_31 : i32
      %38 = arith.index_cast %37 : i32 to index
      %c0_32 = arith.constant 0 : index
      %39 = tpu.strided_load %arg11[%38, %c0_32] {strides = array<i32: 2, 1>} : memref<400x32xf32, #tpu.memory_space<vmem>>, vector<9x32xf32>
      %c3_i32_33 = arith.constant 3 : i32
      %40 = arith.addi %30, %c3_i32_33 : i32
      %41 = arith.index_cast %40 : i32 to index
      %c0_34 = arith.constant 0 : index
      %42 = tpu.strided_load %arg11[%41, %c0_34] {strides = array<i32: 2, 1>} : memref<400x32xf32, #tpu.memory_space<vmem>>, vector<9x32xf32>
      %c2_i32_35 = arith.constant 2 : i32
      %43 = arith.muli %c2_i32_35, %arg14 : i32
      %c2_i32_36 = arith.constant 2 : i32
      %44 = arith.addi %43, %c2_i32_36 : i32
      %c20_i32_37 = arith.constant 20 : i32
      %45 = arith.muli %44, %c20_i32_37 : i32
      %c0_i32_38 = arith.constant 0 : i32
      %46 = arith.addi %45, %c0_i32_38 : i32
      %47 = arith.index_cast %46 : i32 to index
      %c0_39 = arith.constant 0 : index
      %48 = tpu.strided_load %arg11[%47, %c0_39] {strides = array<i32: 2, 1>} : memref<400x32xf32, #tpu.memory_space<vmem>>, vector<9x32xf32>
      %c1_i32_40 = arith.constant 1 : i32
      %49 = arith.addi %45, %c1_i32_40 : i32
      %50 = arith.index_cast %49 : i32 to index
      %c0_41 = arith.constant 0 : index
      %51 = tpu.strided_load %arg11[%50, %c0_41] {strides = array<i32: 2, 1>} : memref<400x32xf32, #tpu.memory_space<vmem>>, vector<9x32xf32>
      %c2_i32_42 = arith.constant 2 : i32
      %52 = arith.addi %45, %c2_i32_42 : i32
      %53 = arith.index_cast %52 : i32 to index
      %c0_43 = arith.constant 0 : index
      %54 = tpu.strided_load %arg11[%53, %c0_43] {strides = array<i32: 2, 1>} : memref<400x32xf32, #tpu.memory_space<vmem>>, vector<9x32xf32>
      %c3_i32_44 = arith.constant 3 : i32
      %55 = arith.addi %45, %c3_i32_44 : i32
      %56 = arith.index_cast %55 : i32 to index
      %c0_45 = arith.constant 0 : index
      %57 = tpu.strided_load %arg11[%56, %c0_45] {strides = array<i32: 2, 1>} : memref<400x32xf32, #tpu.memory_space<vmem>>, vector<9x32xf32>
      %c2_i32_46 = arith.constant 2 : i32
      %58 = arith.muli %c2_i32_46, %arg14 : i32
      %c3_i32_47 = arith.constant 3 : i32
      %59 = arith.addi %58, %c3_i32_47 : i32
      %c20_i32_48 = arith.constant 20 : i32
      %60 = arith.muli %59, %c20_i32_48 : i32
      %c0_i32_49 = arith.constant 0 : i32
      %61 = arith.addi %60, %c0_i32_49 : i32
      %62 = arith.index_cast %61 : i32 to index
      %c0_50 = arith.constant 0 : index
      %63 = tpu.strided_load %arg11[%62, %c0_50] {strides = array<i32: 2, 1>} : memref<400x32xf32, #tpu.memory_space<vmem>>, vector<9x32xf32>
      %c1_i32_51 = arith.constant 1 : i32
      %64 = arith.addi %60, %c1_i32_51 : i32
      %65 = arith.index_cast %64 : i32 to index
      %c0_52 = arith.constant 0 : index
      %66 = tpu.strided_load %arg11[%65, %c0_52] {strides = array<i32: 2, 1>} : memref<400x32xf32, #tpu.memory_space<vmem>>, vector<9x32xf32>
      %c2_i32_53 = arith.constant 2 : i32
      %67 = arith.addi %60, %c2_i32_53 : i32
      %68 = arith.index_cast %67 : i32 to index
      %c0_54 = arith.constant 0 : index
      %69 = tpu.strided_load %arg11[%68, %c0_54] {strides = array<i32: 2, 1>} : memref<400x32xf32, #tpu.memory_space<vmem>>, vector<9x32xf32>
      %c3_i32_55 = arith.constant 3 : i32
      %70 = arith.addi %60, %c3_i32_55 : i32
      %71 = arith.index_cast %70 : i32 to index
      %c0_56 = arith.constant 0 : index
      %72 = tpu.strided_load %arg11[%71, %c0_56] {strides = array<i32: 2, 1>} : memref<400x32xf32, #tpu.memory_space<vmem>>, vector<9x32xf32>
      %73 = tpu.concatenate %18, %21, %24, %27, %33, %36, %39, %42, %48, %51, %54, %57, %63, %66, %69, %72 in 1 : vector<9x32xf32>, vector<9x32xf32>, vector<9x32xf32>, vector<9x32xf32>, vector<9x32xf32>, vector<9x32xf32>, vector<9x32xf32>, vector<9x32xf32>, vector<9x32xf32>, vector<9x32xf32>, vector<9x32xf32>, vector<9x32xf32>, vector<9x32xf32>, vector<9x32xf32>, vector<9x32xf32>, vector<9x32xf32> -> vector<9x512xf32>
      %74 = arith.truncf %73 : vector<9x512xf32> to vector<9x512xbf16>
      %c0_57 = arith.constant 0 : index
      %c0_58 = arith.constant 0 : index
      %75 = vector.load %arg4[%c0_57, %c0_58] : memref<512x64xbf16, #tpu.memory_space<vmem>>, vector<512x64xbf16>
      %cst_59 = arith.constant dense<0.000000e+00> : vector<9x64xf32>
      %76 = tpu.matmul %74, %75, %cst_59 {dimension_numbers = #tpu.dot_dimension_numbers<[1], [0], [0], [1], [0, 0, 1, 1], [], []>} : vector<9x512xbf16>, vector<512x64xbf16>, vector<9x64xf32> -> vector<9x64xf32>
      %c0_60 = arith.constant 0 : index
      %c0_61 = arith.constant 0 : index
      %77 = vector.load %arg5[%c0_60, %c0_61] : memref<1x64xf32, #tpu.memory_space<vmem>>, vector<1x64xf32>
      %78 = vector.broadcast %77 : vector<1x64xf32> to vector<9x64xf32>
      %79 = arith.addf %76, %78 : vector<9x64xf32>
      %cst_62 = arith.constant 0.000000e+00 : f32
      %80 = vector.broadcast %cst_62 : f32 to vector<9x64xf32>
      %81 = arith.maximumf %79, %80 : vector<9x64xf32>
      %c9_i32_63 = arith.constant 9 : i32
      %82 = arith.muli %arg14, %c9_i32_63 : i32
      %83 = arith.index_cast %82 : i32 to index
      %c0_64 = arith.constant 0 : index
      %84 = vector.load %arg12[%83, %c0_64] : memref<81x64xf32, #tpu.memory_space<vmem>>, vector<9x64xf32>
      tpu.vector_store %arg12[%83, %c0_64], %81 {strides = array<i32>} : memref<81x64xf32, #tpu.memory_space<vmem>>, vector<9x64xf32>,
    }
    %c9_i32_3 = arith.constant 9 : i32
    %c0_i32_4 = arith.constant 0 : i32
    %c7_i32 = arith.constant 7 : i32
    %2 = arith.addi %c0_i32_4, %c7_i32 : i32
    %c1_i32_5 = arith.constant 1 : i32
    scf.for %arg14 = %c0_i32_4 to %2 step %c1_i32_5  : i32 {
      %c0_i32_15 = arith.constant 0 : i32
      %13 = arith.addi %arg14, %c0_i32_15 : i32
      %c9_i32_16 = arith.constant 9 : i32
      %14 = arith.muli %13, %c9_i32_16 : i32
      %15 = arith.index_cast %14 : i32 to index
      %c0_17 = arith.constant 0 : index
      %16 = vector.load %arg12[%15, %c0_17] : memref<81x64xf32, #tpu.memory_space<vmem>>, vector<9x64xf32>
      %17 = vector.extract_strided_slice %16 {offsets = [0, 0], sizes = [7, 64], strides = [1, 1]} : vector<9x64xf32> to vector<7x64xf32>
      %18 = vector.extract_strided_slice %16 {offsets = [1, 0], sizes = [7, 64], strides = [1, 1]} : vector<9x64xf32> to vector<7x64xf32>
      %19 = vector.extract_strided_slice %16 {offsets = [2, 0], sizes = [7, 64], strides = [1, 1]} : vector<9x64xf32> to vector<7x64xf32>
      %c1_i32_18 = arith.constant 1 : i32
      %20 = arith.addi %arg14, %c1_i32_18 : i32
      %c9_i32_19 = arith.constant 9 : i32
      %21 = arith.muli %20, %c9_i32_19 : i32
      %22 = arith.index_cast %21 : i32 to index
      %c0_20 = arith.constant 0 : index
      %23 = vector.load %arg12[%22, %c0_20] : memref<81x64xf32, #tpu.memory_space<vmem>>, vector<9x64xf32>
      %24 = vector.extract_strided_slice %23 {offsets = [0, 0], sizes = [7, 64], strides = [1, 1]} : vector<9x64xf32> to vector<7x64xf32>
      %25 = vector.extract_strided_slice %23 {offsets = [1, 0], sizes = [7, 64], strides = [1, 1]} : vector<9x64xf32> to vector<7x64xf32>
      %26 = vector.extract_strided_slice %23 {offsets = [2, 0], sizes = [7, 64], strides = [1, 1]} : vector<9x64xf32> to vector<7x64xf32>
      %c2_i32 = arith.constant 2 : i32
      %27 = arith.addi %arg14, %c2_i32 : i32
      %c9_i32_21 = arith.constant 9 : i32
      %28 = arith.muli %27, %c9_i32_21 : i32
      %29 = arith.index_cast %28 : i32 to index
      %c0_22 = arith.constant 0 : index
      %30 = vector.load %arg12[%29, %c0_22] : memref<81x64xf32, #tpu.memory_space<vmem>>, vector<9x64xf32>
      %31 = vector.extract_strided_slice %30 {offsets = [0, 0], sizes = [7, 64], strides = [1, 1]} : vector<9x64xf32> to vector<7x64xf32>
      %32 = vector.extract_strided_slice %30 {offsets = [1, 0], sizes = [7, 64], strides = [1, 1]} : vector<9x64xf32> to vector<7x64xf32>
      %33 = vector.extract_strided_slice %30 {offsets = [2, 0], sizes = [7, 64], strides = [1, 1]} : vector<9x64xf32> to vector<7x64xf32>
      %34 = tpu.concatenate %17, %18, %19, %24, %25, %26, %31, %32, %33 in 1 : vector<7x64xf32>, vector<7x64xf32>, vector<7x64xf32>, vector<7x64xf32>, vector<7x64xf32>, vector<7x64xf32>, vector<7x64xf32>, vector<7x64xf32>, vector<7x64xf32> -> vector<7x576xf32>
      %35 = arith.truncf %34 : vector<7x576xf32> to vector<7x576xbf16>
      %c0_23 = arith.constant 0 : index
      %c0_24 = arith.constant 0 : index
      %36 = vector.load %arg6[%c0_23, %c0_24] : memref<576x64xbf16, #tpu.memory_space<vmem>>, vector<576x64xbf16>
      %cst_25 = arith.constant dense<0.000000e+00> : vector<7x64xf32>
      %37 = tpu.matmul %35, %36, %cst_25 {dimension_numbers = #tpu.dot_dimension_numbers<[1], [0], [0], [1], [0, 0, 1, 1], [], []>} : vector<7x576xbf16>, vector<576x64xbf16>, vector<7x64xf32> -> vector<7x64xf32>
      %c0_26 = arith.constant 0 : index
      %c0_27 = arith.constant 0 : index
      %38 = vector.load %arg7[%c0_26, %c0_27] : memref<1x64xf32, #tpu.memory_space<vmem>>, vector<1x64xf32>
      %39 = vector.broadcast %38 : vector<1x64xf32> to vector<7x64xf32>
      %40 = arith.addf %37, %39 : vector<7x64xf32>
      %cst_28 = arith.constant 0.000000e+00 : f32
      %41 = vector.broadcast %cst_28 : f32 to vector<7x64xf32>
      %42 = arith.maximumf %40, %41 : vector<7x64xf32>
      %c7_i32_29 = arith.constant 7 : i32
      %43 = arith.muli %arg14, %c7_i32_29 : i32
      %44 = arith.index_cast %43 : i32 to index
      %c0_30 = arith.constant 0 : index
      %45 = vector.load %arg13[%44, %c0_30] : memref<49x64xf32, #tpu.memory_space<vmem>>, vector<7x64xf32>
      tpu.vector_store %arg13[%44, %c0_30], %42 {strides = array<i32>} : memref<49x64xf32, #tpu.memory_space<vmem>>, vector<7x64xf32>,
    }
    %c7_i32_6 = arith.constant 7 : i32
    %cst = arith.constant 0.000000e+00 : f32
    %3 = vector.broadcast %cst : f32 to vector<1x128xf32>
    %c0_i32_7 = arith.constant 0 : i32
    %c49_i32 = arith.constant 49 : i32
    %4 = arith.addi %c0_i32_7, %c49_i32 : i32
    %c1_i32_8 = arith.constant 1 : i32
    %5 = scf.for %arg14 = %c0_i32_7 to %4 step %c1_i32_8 iter_args(%arg15 = %3) -> (vector<1x128xf32>)  : i32 {
      %13 = arith.index_cast %arg14 : i32 to index
      %c0_15 = arith.constant 0 : index
      %14 = vector.load %arg13[%13, %c0_15] : memref<49x64xf32, #tpu.memory_space<vmem>>, vector<1x64xf32>
      %15 = arith.truncf %14 : vector<1x64xf32> to vector<1x64xbf16>
      %c64_i32 = arith.constant 64 : i32
      %16 = arith.muli %arg14, %c64_i32 : i32
      %17 = tpu.assume_multiple %16, 64 : i32
      %18 = arith.index_cast %17 : i32 to index
      %c0_16 = arith.constant 0 : index
      %19 = vector.load %arg8[%18, %c0_16] : memref<3136x128xbf16, #tpu.memory_space<vmem>>, vector<64x128xbf16>
      %cst_17 = arith.constant dense<0.000000e+00> : vector<1x128xf32>
      %20 = tpu.matmul %15, %19, %cst_17 {dimension_numbers = #tpu.dot_dimension_numbers<[1], [0], [0], [1], [0, 0, 1, 1], [], []>} : vector<1x64xbf16>, vector<64x128xbf16>, vector<1x128xf32> -> vector<1x128xf32>
      %21 = arith.addf %arg15, %20 : vector<1x128xf32>
      scf.yield %21 : vector<1x128xf32>
    }
    %c49_i32_9 = arith.constant 49 : i32
    %c0 = arith.constant 0 : index
    %c0_10 = arith.constant 0 : index
    %6 = vector.load %arg9[%c0, %c0_10] : memref<1x128xf32, #tpu.memory_space<vmem>>, vector<1x128xf32>
    %7 = arith.addf %5, %6 : vector<1x128xf32>
    %cst_11 = arith.constant 0.000000e+00 : f32
    %8 = vector.broadcast %cst_11 : f32 to vector<1x128xf32>
    %9 = arith.maximumf %7, %8 : vector<1x128xf32>
    %c0_12 = arith.constant 0 : index
    %c0_13 = arith.constant 0 : index
    %c0_14 = arith.constant 0 : index
    %10 = vector.load %arg10[%c0_12, %c0_13, %c0_14] : memref<1x1x128xf32, #tpu.memory_space<vmem>>, vector<1x1x128xf32>
    %11 = vector.shape_cast %10 : vector<1x1x128xf32> to vector<1x128xf32>
    %12 = vector.shape_cast %9 : vector<1x128xf32> to vector<1x1x128xf32>
    tpu.vector_store %arg10[%c0_12, %c0_13, %c0_14], %12 {strides = array<i32>} : memref<1x1x128xf32, #tpu.memory_space<vmem>>, vector<1x1x128xf32>,
    return
  }
  func.func @transform_0(%arg0: i32) -> (i32, i32, i32) {
    %c0_i32 = arith.constant 0 : i32
    %c0_i32_0 = arith.constant 0 : i32
    %c0_i32_1 = arith.constant 0 : i32
    return %arg0, %c0_i32, %c0_i32_0 : i32, i32, i32
  }
  func.func @transform_1(%arg0: i32) -> (i32, i32) {
    %c0_i32 = arith.constant 0 : i32
    %c0_i32_0 = arith.constant 0 : i32
    %c0_i32_1 = arith.constant 0 : i32
    return %c0_i32, %c0_i32_0 : i32, i32
  }
  func.func @transform_2(%arg0: i32) -> (i32, i32) {
    %c0_i32 = arith.constant 0 : i32
    %c0_i32_0 = arith.constant 0 : i32
    %c0_i32_1 = arith.constant 0 : i32
    return %c0_i32, %c0_i32_0 : i32, i32
  }
  func.func @transform_3(%arg0: i32) -> (i32, i32) {
    %c0_i32 = arith.constant 0 : i32
    %c0_i32_0 = arith.constant 0 : i32
    %c0_i32_1 = arith.constant 0 : i32
    return %c0_i32, %c0_i32_0 : i32, i32
  }
  func.func @transform_4(%arg0: i32) -> (i32, i32) {
    %c0_i32 = arith.constant 0 : i32
    %c0_i32_0 = arith.constant 0 : i32
    %c0_i32_1 = arith.constant 0 : i32
    return %c0_i32, %c0_i32_0 : i32, i32
  }
  func.func @transform_5(%arg0: i32) -> (i32, i32) {
    %c0_i32 = arith.constant 0 : i32
    %c0_i32_0 = arith.constant 0 : i32
    %c0_i32_1 = arith.constant 0 : i32
    return %c0_i32, %c0_i32_0 : i32, i32
  }
  func.func @transform_6(%arg0: i32) -> (i32, i32) {
    %c0_i32 = arith.constant 0 : i32
    %c0_i32_0 = arith.constant 0 : i32
    %c0_i32_1 = arith.constant 0 : i32
    return %c0_i32, %c0_i32_0 : i32, i32
  }
  func.func @transform_7(%arg0: i32) -> (i32, i32) {
    %c0_i32 = arith.constant 0 : i32
    %c0_i32_0 = arith.constant 0 : i32
    %c0_i32_1 = arith.constant 0 : i32
    return %c0_i32, %c0_i32_0 : i32, i32
  }
  func.func @transform_8(%arg0: i32) -> (i32, i32) {
    %c0_i32 = arith.constant 0 : i32
    %c0_i32_0 = arith.constant 0 : i32
    %c0_i32_1 = arith.constant 0 : i32
    return %c0_i32, %c0_i32_0 : i32, i32
  }
  func.func @transform_9(%arg0: i32) -> (i32, i32, i32) {
    %c0_i32 = arith.constant 0 : i32
    %c0_i32_0 = arith.constant 0 : i32
    %c0_i32_1 = arith.constant 0 : i32
    return %arg0, %c0_i32, %c0_i32_0 : i32, i32, i32
  }
}

</mosaic_0001>

<llo_original>
// kernel: cnn_encoder_forward.1
$region0: #{cnn_encoder_forward.1}
  #allocation0 [shape = 'u32[]', space=smem, size = 0x4, offset = 0x4, fixed_abs, tag = 'smem constant byte address 0x4 - core index']
  #allocation1 [shape = 'u32[144,128]{1,0:T(1,128)}', space=vmem, size = 0x12000, scoped, tag = 'internal scratch']
  #allocation2 [shape = 'f32[400,32]{1,0:T(8,128)}', space=vmem, size = 0x32000, scoped, tag = 'scratch operand']
  #allocation3 [shape = 'f32[81,64]{1,0:T(8,128)}', space=vmem, size = 0xb000, scoped, tag = 'scratch operand']
  #allocation4 [shape = 'f32[49,64]{1,0:T(8,128)}', space=vmem, size = 0x7000, scoped, tag = 'scratch operand']
  %s0 = inlined_call_operand.vmem [shape: f32[2,1764,16], index: 0, kind: input, shape index: {}]
  %s1 = inlined_call_operand.vmem [shape: bf16[256,32], index: 1, kind: input, shape index: {}]
  %s2 = inlined_call_operand.vmem [shape: f32[1,32], index: 2, kind: input, shape index: {}]
  %s3 = inlined_call_operand.vmem [shape: bf16[512,64], index: 3, kind: input, shape index: {}]
  %s4 = inlined_call_operand.vmem [shape: f32[1,64], index: 4, kind: input, shape index: {}]
  %s5 = inlined_call_operand.vmem [shape: bf16[576,64], index: 5, kind: input, shape index: {}]
  %s6 = inlined_call_operand.vmem [shape: f32[1,64], index: 6, kind: input, shape index: {}]
  %s7 = inlined_call_operand.vmem [shape: bf16[3136,128], index: 7, kind: input, shape index: {}]
  %s8 = inlined_call_operand.vmem [shape: f32[1,128], index: 8, kind: input, shape index: {}]
  %s9 = inlined_call_operand.hbm [shape: f32[2,1,128], index: 9, kind: output, shape index: {}]
  %s10 = sld [smem:[#allocation0]]
  $region97: #{cnn_encoder_forward.1} parent=0
    _
  %s12 = ssub.s32 1, %s10
  %s13 = scalar_select 0, %s12, %s10
  $region1: #{cnn_encoder_forward.1} parent=0
    #allocation5 [shape = 'u8[1024]{0}', space=vmem, size = 0x400, scoped, tag = 'output window, operand 0']
    #allocation6 [shape = 's32[2]{0}', space=sflag, size = 0x8, scoped, tag = 'scoped memory for cnn_encoder_forward.1']
    %14 = vsyncpa [#allocation6], 0
    %s15 = scalar_lea.sflag [#allocation6], 1
    %16 = vsyncpa %s15, 0
    loop: start=0, step=1, limit=4
    $region2: #{cnn_encoder_forward.1} parent=1 // loop_pre_header
      _
    $region3: #{cnn_encoder_forward.1} parent=1 // loop_header
      %s18 = sphi 0, %s22
      %p19 = scmp.ge.s32.totalorder %s18, 4
      %s28 = sphi 0, %s30
      %s31 = sphi 0, %s28
      %s32 = sphi 0, %s31
      %s48 = sphi 0, %s32
      %s52 = sphi 0, %s52
      %s54 = sphi 0, %s52
      %s55 = sphi 0, %s54
      %s69 = sphi 0, %s55
      %s73 = sphi 0, %s73
      %s75 = sphi 0, %s73
      %s76 = sphi 0, %s75
      %s90 = sphi 0, %s76
      %s94 = sphi 0, %s94
      %s96 = sphi 0, %s94
      %s97 = sphi 0, %s96
      %s111 = sphi 0, %s97
      %s115 = sphi 0, %s115
      %s117 = sphi 0, %s115
      %s118 = sphi 0, %s117
      %s132 = sphi 0, %s118
      %s136 = sphi 0, %s136
      %s138 = sphi 0, %s136
      %s139 = sphi 0, %s138
      %s153 = sphi 0, %s139
      %s157 = sphi 0, %s157
      %s159 = sphi 0, %s157
      %s160 = sphi 0, %s159
      %s174 = sphi 0, %s160
      %s178 = sphi 0, %s178
      %s180 = sphi 0, %s178
      %s181 = sphi 0, %s180
      %s195 = sphi 0, %s181
      %s199 = sphi 0, %s199
      %s201 = sphi 0, %s199
      %s202 = sphi 0, %s201
      %s216 = sphi 0, %s202
      %s222 = sphi 0, %s224
      %s225 = sphi 0, %s222
      %s226 = sphi 0, %s225
      %s242 = sphi 0, %s226
    $region4: #{cnn_encoder_forward.1} parent=1 // loop_header_branch
      %21 = sbr.rel (%p19) target = $region8
    $region5: #{cnn_encoder_forward.1} parent=1 // loop_body
      %s23 = ssub.s32 %s18, 1
      %s24 = ssub.s32 %s18, 2
      %s25 = sadd.s32 %s18, 1
      %s26 = ssub.s32 %s18, %s25
      %p27 = scmp.eq.s32.totalorder %s26, 0
      %s29 = sadd.s32 %s28, 1
      %s30 = scalar_select %p27, %s28, %s29
      %p33 = pneg %p27
      %p34 = scmp.eq.s32.totalorder %s18, 1
      %p35 = por %p33, %p34
      %p36 = scmp.ne.s32.totalorder %s28, %s31
      %p37 = scmp.eq.s32.totalorder %s18, 0
      %p38 = por %p36, %p37
      %p39 = scmp.ne.s32.totalorder %s28, %s31
      %p40 = scmp.eq.s32.totalorder %s23, 1
      %p41 = por %p39, %p40
      %p42 = scmp.ne.s32.totalorder %s31, %s32
      %p43 = scmp.eq.s32.totalorder %s23, 0
      %p44 = por %p42, %p43
      %p45 = scmp.ne.s32.totalorder %s31, %s32
      %p46 = scmp.eq.s32.totalorder %s24, 1
      %p47 = por %p45, %p46
      %p49 = scmp.ne.s32.totalorder %s32, %s48
      %p50 = scmp.eq.s32.totalorder %s24, 0
      %p51 = por %p49, %p50
      %s53 = sadd.s32 %s52, 1
      %p56 = scmp.eq.s32.totalorder %s18, 1
      %p57 = scmp.ne.s32.totalorder %s52, %s54
      %p58 = scmp.eq.s32.totalorder %s18, 0
      %p59 = por %p57, %p58
      %p60 = scmp.ne.s32.totalorder %s52, %s54
      %p61 = scmp.eq.s32.totalorder %s23, 1
      %p62 = por %p60, %p61
      %p63 = scmp.ne.s32.totalorder %s54, %s55
      %p64 = scmp.eq.s32.totalorder %s23, 0
      %p65 = por %p63, %p64
      %p66 = scmp.ne.s32.totalorder %s54, %s55
      %p67 = scmp.eq.s32.totalorder %s24, 1
      %p68 = por %p66, %p67
      %p70 = scmp.ne.s32.totalorder %s55, %s69
      %p71 = scmp.eq.s32.totalorder %s24, 0
      %p72 = por %p70, %p71
      %s74 = sadd.s32 %s73, 1
      %p77 = scmp.eq.s32.totalorder %s18, 1
      %p78 = scmp.ne.s32.totalorder %s73, %s75
      %p79 = scmp.eq.s32.totalorder %s18, 0
      %p80 = por %p78, %p79
      %p81 = scmp.ne.s32.totalorder %s73, %s75
      %p82 = scmp.eq.s32.totalorder %s23, 1
      %p83 = por %p81, %p82
      %p84 = scmp.ne.s32.totalorder %s75, %s76
      %p85 = scmp.eq.s32.totalorder %s23, 0
      %p86 = por %p84, %p85
      %p87 = scmp.ne.s32.totalorder %s75, %s76
      %p88 = scmp.eq.s32.totalorder %s24, 1
      %p89 = por %p87, %p88
      %p91 = scmp.ne.s32.totalorder %s76, %s90
      %p92 = scmp.eq.s32.totalorder %s24, 0
      %p93 = por %p91, %p92
      %s95 = sadd.s32 %s94, 1
      %p98 = scmp.eq.s32.totalorder %s18, 1
      %p99 = scmp.ne.s32.totalorder %s94, %s96
      %p100 = scmp.eq.s32.totalorder %s18, 0
      %p101 = por %p99, %p100
      %p102 = scmp.ne.s32.totalorder %s94, %s96
      %p103 = scmp.eq.s32.totalorder %s23, 1
      %p104 = por %p102, %p103
      %p105 = scmp.ne.s32.totalorder %s96, %s97
      %p106 = scmp.eq.s32.totalorder %s23, 0
      %p107 = por %p105, %p106
      %p108 = scmp.ne.s32.totalorder %s96, %s97
      %p109 = scmp.eq.s32.totalorder %s24, 1
      %p110 = por %p108, %p109
      %p112 = scmp.ne.s32.totalorder %s97, %s111
      %p113 = scmp.eq.s32.totalorder %s24, 0
      %p114 = por %p112, %p113
      %s116 = sadd.s32 %s115, 1
      %p119 = scmp.eq.s32.totalorder %s18, 1
      %p120 = scmp.ne.s32.totalorder %s115, %s117
      %p121 = scmp.eq.s32.totalorder %s18, 0
      %p122 = por %p120, %p121
      %p123 = scmp.ne.s32.totalorder %s115, %s117
      %p124 = scmp.eq.s32.totalorder %s23, 1
      %p125 = por %p123, %p124
      %p126 = scmp.ne.s32.totalorder %s117, %s118
      %p127 = scmp.eq.s32.totalorder %s23, 0
      %p128 = por %p126, %p127
      %p129 = scmp.ne.s32.totalorder %s117, %s118
      %p130 = scmp.eq.s32.totalorder %s24, 1
      %p131 = por %p129, %p130
      %p133 = scmp.ne.s32.totalorder %s118, %s132
      %p134 = scmp.eq.s32.totalorder %s24, 0
      %p135 = por %p133, %p134
      %s137 = sadd.s32 %s136, 1
      %p140 = scmp.eq.s32.totalorder %s18, 1
      %p141 = scmp.ne.s32.totalorder %s136, %s138
      %p142 = scmp.eq.s32.totalorder %s18, 0
      %p143 = por %p141, %p142
      %p144 = scmp.ne.s32.totalorder %s136, %s138
      %p145 = scmp.eq.s32.totalorder %s23, 1
      %p146 = por %p144, %p145
      %p147 = scmp.ne.s32.totalorder %s138, %s139
      %p148 = scmp.eq.s32.totalorder %s23, 0
      %p149 = por %p147, %p148
      %p150 = scmp.ne.s32.totalorder %s138, %s139
      %p151 = scmp.eq.s32.totalorder %s24, 1
      %p152 = por %p150, %p151
      %p154 = scmp.ne.s32.totalorder %s139, %s153
      %p155 = scmp.eq.s32.totalorder %s24, 0
      %p156 = por %p154, %p155
      %s158 = sadd.s32 %s157, 1
      %p161 = scmp.eq.s32.totalorder %s18, 1
      %p162 = scmp.ne.s32.totalorder %s157, %s159
      %p163 = scmp.eq.s32.totalorder %s18, 0
      %p164 = por %p162, %p163
      %p165 = scmp.ne.s32.totalorder %s157, %s159
      %p166 = scmp.eq.s32.totalorder %s23, 1
      %p167 = por %p165, %p166
      %p168 = scmp.ne.s32.totalorder %s159, %s160
      %p169 = scmp.eq.s32.totalorder %s23, 0
      %p170 = por %p168, %p169
      %p171 = scmp.ne.s32.totalorder %s159, %s160
      %p172 = scmp.eq.s32.totalorder %s24, 1
      %p173 = por %p171, %p172
      %p175 = scmp.ne.s32.totalorder %s160, %s174
      %p176 = scmp.eq.s32.totalorder %s24, 0
      %p177 = por %p175, %p176
      %s179 = sadd.s32 %s178, 1
      %p182 = scmp.eq.s32.totalorder %s18, 1
      %p183 = scmp.ne.s32.totalorder %s178, %s180
      %p184 = scmp.eq.s32.totalorder %s18, 0
      %p185 = por %p183, %p184
      %p186 = scmp.ne.s32.totalorder %s178, %s180
      %p187 = scmp.eq.s32.totalorder %s23, 1
      %p188 = por %p186, %p187
      %p189 = scmp.ne.s32.totalorder %s180, %s181
      %p190 = scmp.eq.s32.totalorder %s23, 0
      %p191 = por %p189, %p190
      %p192 = scmp.ne.s32.totalorder %s180, %s181
      %p193 = scmp.eq.s32.totalorder %s24, 1
      %p194 = por %p192, %p193
      %p196 = scmp.ne.s32.totalorder %s181, %s195
      %p197 = scmp.eq.s32.totalorder %s24, 0
      %p198 = por %p196, %p197
      %s200 = sadd.s32 %s199, 1
      %p203 = scmp.eq.s32.totalorder %s18, 1
      %p204 = scmp.ne.s32.totalorder %s199, %s201
      %p205 = scmp.eq.s32.totalorder %s18, 0
      %p206 = por %p204, %p205
      %p207 = scmp.ne.s32.totalorder %s199, %s201
      %p208 = scmp.eq.s32.totalorder %s23, 1
      %p209 = por %p207, %p208
      %p210 = scmp.ne.s32.totalorder %s201, %s202
      %p211 = scmp.eq.s32.totalorder %s23, 0
      %p212 = por %p210, %p211
      %p213 = scmp.ne.s32.totalorder %s201, %s202
      %p214 = scmp.eq.s32.totalorder %s24, 1
      %p215 = por %p213, %p214
      %p217 = scmp.ne.s32.totalorder %s202, %s216
      %p218 = scmp.eq.s32.totalorder %s24, 0
      %p219 = por %p217, %p218
      %s220 = ssub.s32 %s18, %s25
      %p221 = scmp.eq.s32.totalorder %s220, 0
      %s223 = sadd.s32 %s222, 1
      %s224 = scalar_select %p221, %s222, %s223
      %p227 = pneg %p221
      %p228 = scmp.eq.s32.totalorder %s18, 1
      %p229 = por %p227, %p228
      %p230 = scmp.ne.s32.totalorder %s222, %s225
      %p231 = scmp.eq.s32.totalorder %s18, 0
      %p232 = por %p230, %p231
      %p233 = scmp.ne.s32.totalorder %s222, %s225
      %p234 = scmp.eq.s32.totalorder %s23, 1
      %p235 = por %p233, %p234
      %p236 = scmp.ne.s32.totalorder %s225, %s226
      %p237 = scmp.eq.s32.totalorder %s23, 0
      %p238 = por %p236, %p237
      %p239 = scmp.ne.s32.totalorder %s225, %s226
      %p240 = scmp.eq.s32.totalorder %s24, 1
      %p241 = por %p239, %p240
      %p243 = scmp.ne.s32.totalorder %s226, %s242
      %p244 = scmp.eq.s32.totalorder %s24, 0
      %p245 = por %p243, %p244
      %p246 = scmp.le.s32.totalorder 1, %s18
      %p247 = scmp.lt.s32.totalorder %s18, 3
      %p248 = pnand %p246, %p247
      %p249 = pneg %p248
      // Predicated region
      $region9: #{cnn_encoder_forward.1} parent=5 // pred_check
        _
      $region10: #{cnn_encoder_forward.1} parent=5 // pred_check_branch
        %251 = sbr.rel (%p248) target = $region12
      $region11: #{cnn_encoder_forward.1} parent=5 // pred_region
        %s252 = ssub.s32 %s18, 1
        // Predicated region
        $region13: #{cnn_encoder_forward.1} parent=11 // pred_check
          %p253 = pneg %p65
        $region14: #{cnn_encoder_forward.1} parent=11 // pred_check_branch
          %255 = sbr.rel (%p253) target = $region16
        $region15: #{cnn_encoder_forward.1} parent=11 // pred_region
          _
        $region16: #{cnn_encoder_forward.1} parent=11 // pred_fallthru
          _
        // Predicated region
        $region17: #{cnn_encoder_forward.1} parent=11 // pred_check
          %p256 = pneg %p86
        $region18: #{cnn_encoder_forward.1} parent=11 // pred_check_branch
          %258 = sbr.rel (%p256) target = $region20
        $region19: #{cnn_encoder_forward.1} parent=11 // pred_region
          _
        $region20: #{cnn_encoder_forward.1} parent=11 // pred_fallthru
          _
        // Predicated region
        $region21: #{cnn_encoder_forward.1} parent=11 // pred_check
          %p259 = pneg %p107
        $region22: #{cnn_encoder_forward.1} parent=11 // pred_check_branch
          %261 = sbr.rel (%p259) target = $region24
        $region23: #{cnn_encoder_forward.1} parent=11 // pred_region
          _
        $region24: #{cnn_encoder_forward.1} parent=11 // pred_fallthru
          _
        // Predicated region
        $region25: #{cnn_encoder_forward.1} parent=11 // pred_check
          %p262 = pneg %p128
        $region26: #{cnn_encoder_forward.1} parent=11 // pred_check_branch
          %264 = sbr.rel (%p262) target = $region28
        $region27: #{cnn_encoder_forward.1} parent=11 // pred_region
          _
        $region28: #{cnn_encoder_forward.1} parent=11 // pred_fallthru
          _
        // Predicated region
        $region29: #{cnn_encoder_forward.1} parent=11 // pred_check
          %p265 = pneg %p149
        $region30: #{cnn_encoder_forward.1} parent=11 // pred_check_branch
          %267 = sbr.rel (%p265) target = $region32
        $region31: #{cnn_encoder_forward.1} parent=11 // pred_region
          _
        $region32: #{cnn_encoder_forward.1} parent=11 // pred_fallthru
          _
        // Predicated region
        $region33: #{cnn_encoder_forward.1} parent=11 // pred_check
          %p268 = pneg %p170
        $region34: #{cnn_encoder_forward.1} parent=11 // pred_check_branch
          %270 = sbr.rel (%p268) target = $region36
        $region35: #{cnn_encoder_forward.1} parent=11 // pred_region
          _
        $region36: #{cnn_encoder_forward.1} parent=11 // pred_fallthru
          _
        // Predicated region
        $region37: #{cnn_encoder_forward.1} parent=11 // pred_check
          %p271 = pneg %p191
        $region38: #{cnn_encoder_forward.1} parent=11 // pred_check_branch
          %273 = sbr.rel (%p271) target = $region40
        $region39: #{cnn_encoder_forward.1} parent=11 // pred_region
          _
        $region40: #{cnn_encoder_forward.1} parent=11 // pred_fallthru
          _
        // Predicated region
        $region41: #{cnn_encoder_forward.1} parent=11 // pred_check
          %p274 = pneg %p212
        $region42: #{cnn_encoder_forward.1} parent=11 // pred_check_branch
          %276 = sbr.rel (%p274) target = $region44
        $region43: #{cnn_encoder_forward.1} parent=11 // pred_region
          _
        $region44: #{cnn_encoder_forward.1} parent=11 // pred_fallthru
          _
      $region12: #{cnn_encoder_forward.1} parent=5 // pred_fallthru
        _
      %p277 = scmp.lt.s32.totalorder %s18, 2
      // Predicated region
      $region45: #{cnn_encoder_forward.1} parent=5 // pred_check
        %p278 = pneg %p277
      $region46: #{cnn_encoder_forward.1} parent=5 // pred_check_branch
        %280 = sbr.rel (%p278) target = $region48
      $region47: #{cnn_encoder_forward.1} parent=5 // pred_region
        // Predicated region
        $region49: #{cnn_encoder_forward.1} parent=47 // pred_check
          %p281 = pneg %p38
        $region50: #{cnn_encoder_forward.1} parent=47 // pred_check_branch
          %283 = sbr.rel (%p281) target = $region52
        $region51: #{cnn_encoder_forward.1} parent=47 // pred_region
          %p284 = scmp.lt.s32.totalorder %s18, 1
          %s285 = scalar_select %p284, %s18, 1
          %s286 = smul.addr %s285, 221
          %s287 = smul.addr %s286, 8
          %s288 = scalar_lea.vmem %s0, %s287
        $region52: #{cnn_encoder_forward.1} parent=47 // pred_fallthru
          _
      $region48: #{cnn_encoder_forward.1} parent=5 // pred_fallthru
        _
      %p289 = scmp.le.s32.totalorder 1, %s18
      %p290 = scmp.lt.s32.totalorder %s18, 3
      %p291 = pnand %p289, %p290
      %p292 = pneg %p291
      // Predicated region
      $region53: #{cnn_encoder_forward.1} parent=5 // pred_check
        _
      $region54: #{cnn_encoder_forward.1} parent=5 // pred_check_branch
        %294 = sbr.rel (%p291) target = $region56
      $region55: #{cnn_encoder_forward.1} parent=5 // pred_region
        %s295 = ssub.s32 %s18, 1
        %p296 = scmp.lt.s32.totalorder %s23, 1
        %s297 = scalar_select %p296, %s23, 1
        %s298 = smul.addr %s297, 221
        %s299 = smul.addr %s298, 8
        %s300 = scalar_lea.vmem %s0, %s299
        %p301 = pneg %p44
        %p302 = pneg %p41
        %p303 = pneg %p65
        %p304 = pneg %p62
        %p305 = pneg %p86
        %p306 = pneg %p83
        %p307 = pneg %p107
        %p308 = pneg %p104
        %p309 = pneg %p128
        %p310 = pneg %p125
        %p311 = pneg %p149
        %p312 = pneg %p146
        %p313 = pneg %p170
        %p314 = pneg %p167
        %p315 = pneg %p191
        %p316 = pneg %p188
        %p317 = pneg %p212
        %p318 = pneg %p209
        %p319 = pneg %p238
        %p320 = pneg %p235
        %s321 = sand.u32 %s225, 1
        %s322 = scalar_lea.sflag [#allocation6], %s321
        %s323 = sand.u32 %s225, 1
        %s324 = scalar_lea.vmem [#allocation5], %s323
        %p325 = scmp.lt.s32.totalorder %s23, 1
        %s326 = scalar_select %p325, %s23, 1
        %s327 = smul.addr %s326, 221
        %s328 = smul.addr %s327, 8
        %s329 = scalar_lea.vmem %s0, %s328
        loop: start=0, step=1, limit=20
        $region57: #{cnn_encoder_forward.1} parent=55 // loop_pre_header
          _
        $region58: #{cnn_encoder_forward.1} parent=55 // loop_header
          %s332 = sphi 0, %s336
          %p333 = scmp.ge.s32.totalorder %s332, 20
        $region59: #{cnn_encoder_forward.1} parent=55 // loop_header_branch
          %335 = sbr.rel (%p333) target = $region63
        $region60: #{cnn_encoder_forward.1} parent=55 // loop_body
          %s337 = smul.u32 %s332, 84
          %s338 = scalar_lea.vmem %s329, %s337
          %v339 = vld [vmem:[%s338] sm:$0xff]
          %v340 = vld [vmem:[%s338 + $0x8] sm:$0xff]
          %v341 = vld [vmem:[%s338 + $0x10] sm:$0x1f]
          %s342 = smul.u32 %s332, 4
          %s343 = sadd.s32 %s342, 1
          %s344 = smul.u32 %s343, 21
          %s345 = scalar_lea.vmem %s329, %s344
          %v346 = vld [vmem:[%s345] sm:$0xff]
          %v347 = vld [vmem:[%s345 + $0x8] sm:$0xff]
          %v348 = vld [vmem:[%s345 + $0x10] sm:$0x1f]
          %s349 = sadd.s32 %s342, 2
          %s350 = smul.u32 %s349, 21
          %s351 = scalar_lea.vmem %s329, %s350
          %v352 = vld [vmem:[%s351] sm:$0xff]
          %v353 = vld [vmem:[%s351 + $0x8] sm:$0xff]
          %v354 = vld [vmem:[%s351 + $0x10] sm:$0x1f]
          %s355 = sadd.s32 %s342, 3
          %s356 = smul.u32 %s355, 21
          %s357 = scalar_lea.vmem %s329, %s356
          %v358 = vld [vmem:[%s357] sm:$0xff]
          %v359 = vld [vmem:[%s357 + $0x8] sm:$0xff]
          %v360 = vld [vmem:[%s357 + $0x10] sm:$0x1f]
          %s361 = sadd.s32 %s342, 4
          %s362 = smul.u32 %s361, 21
          %s363 = scalar_lea.vmem %s329, %s362
          %v364 = vld [vmem:[%s363] sm:$0xff]
          %v365 = vld [vmem:[%s363 + $0x8] sm:$0xff]
          %v366 = vld [vmem:[%s363 + $0x10] sm:$0x1f]
          %s367 = sadd.s32 %s342, 5
          %s368 = smul.u32 %s367, 21
          %s369 = scalar_lea.vmem %s329, %s368
          %v370 = vld [vmem:[%s369] sm:$0xff]
          %v371 = vld [vmem:[%s369 + $0x8] sm:$0xff]
          %v372 = vld [vmem:[%s369 + $0x10] sm:$0x1f]
          %s373 = sadd.s32 %s342, 6
          %s374 = smul.u32 %s373, 21
          %s375 = scalar_lea.vmem %s329, %s374
          %v376 = vld [vmem:[%s375] sm:$0xff]
          %v377 = vld [vmem:[%s375 + $0x8] sm:$0xff]
          %v378 = vld [vmem:[%s375 + $0x10] sm:$0x1f]
          %s379 = sadd.s32 %s342, 7
          %s380 = smul.u32 %s379, 21
          %s381 = scalar_lea.vmem %s329, %s380
          %v382 = vld [vmem:[%s381] sm:$0xff]
          %v383 = vld [vmem:[%s381 + $0x8] sm:$0xff]
          %v384 = vld [vmem:[%s381 + $0x10] sm:$0x1f]
          %vm388 = vcmask 1046528
          %v389 = vrot.slane %v339, 1
          %v390 = vrot.slane %v340, 1
          %v391 = vsel %vm388, %v389, %v390
          %v392 = vrot.slane %v341, 1
          %v393 = vsel %vm388, %v390, %v392
          %394 = vrot.lane.b32.xlu0 %v391, 16
          %v395 = vpop.permute.xlu0 %394
          %396 = vrot.lane.b32.xlu0 %v393, 16
          %v397 = vpop.permute.xlu0 %396
          %398 = vrot.lane.b32.xlu0 %v392, 16
          %v399 = vpop.permute.xlu0 %398
          %406 = vrot.lane.b32.xlu0 %v346, 32
          %v407 = vpop.permute.xlu0 %406
          %408 = vrot.lane.b32.xlu0 %v347, 32
          %v409 = vpop.permute.xlu0 %408
          %410 = vrot.lane.b32.xlu0 %v348, 32
          %v411 = vpop.permute.xlu0 %410
          %v415 = vrot.slane %v346, 1
          %v416 = vrot.slane %v347, 1
          %v417 = vsel %vm388, %v415, %v416
          %v418 = vrot.slane %v348, 1
          %v419 = vsel %vm388, %v416, %v418
          %420 = vrot.lane.b32.xlu0 %v417, 48
          %v421 = vpop.permute.xlu0 %420
          %422 = vrot.lane.b32.xlu0 %v419, 48
          %v423 = vpop.permute.xlu0 %422
          %424 = vrot.lane.b32.xlu0 %v418, 48
          %v425 = vpop.permute.xlu0 %424
          %432 = vrot.lane.b32.xlu0 %v352, 64
          %v433 = vpop.permute.xlu0 %432
          %434 = vrot.lane.b32.xlu0 %v353, 64
          %v435 = vpop.permute.xlu0 %434
          %436 = vrot.lane.b32.xlu0 %v354, 64
          %v437 = vpop.permute.xlu0 %436
          %v441 = vrot.slane %v352, 1
          %v442 = vrot.slane %v353, 1
          %v443 = vsel %vm388, %v441, %v442
          %v444 = vrot.slane %v354, 1
          %v445 = vsel %vm388, %v442, %v444
          %446 = vrot.lane.b32.xlu0 %v443, 80
          %v447 = vpop.permute.xlu0 %446
          %448 = vrot.lane.b32.xlu0 %v445, 80
          %v449 = vpop.permute.xlu0 %448
          %450 = vrot.lane.b32.xlu0 %v444, 80
          %v451 = vpop.permute.xlu0 %450
          %458 = vrot.lane.b32.xlu0 %v358, 96
          %v459 = vpop.permute.xlu0 %458
          %460 = vrot.lane.b32.xlu0 %v359, 96
          %v461 = vpop.permute.xlu0 %460
          %462 = vrot.lane.b32.xlu0 %v360, 96
          %v463 = vpop.permute.xlu0 %462
          %v467 = vrot.slane %v358, 1
          %v468 = vrot.slane %v359, 1
          %v469 = vsel %vm388, %v467, %v468
          %v470 = vrot.slane %v360, 1
          %v471 = vsel %vm388, %v468, %v470
          %472 = vrot.lane.b32.xlu0 %v469, 112
          %v473 = vpop.permute.xlu0 %472
          %474 = vrot.lane.b32.xlu0 %v471, 112
          %v475 = vpop.permute.xlu0 %474
          %476 = vrot.lane.b32.xlu0 %v470, 112
          %v477 = vpop.permute.xlu0 %476
          %v484 = vrot.slane %v364, 1
          %v485 = vrot.slane %v365, 1
          %v486 = vsel %vm388, %v484, %v485
          %v487 = vrot.slane %v366, 1
          %v488 = vsel %vm388, %v485, %v487
          %489 = vrot.lane.b32.xlu0 %v486, 16
          %v490 = vpop.permute.xlu0 %489
          %491 = vrot.lane.b32.xlu0 %v488, 16
          %v492 = vpop.permute.xlu0 %491
          %493 = vrot.lane.b32.xlu0 %v487, 16
          %v494 = vpop.permute.xlu0 %493
          %501 = vrot.lane.b32.xlu0 %v370, 32
          %v502 = vpop.permute.xlu0 %501
          %503 = vrot.lane.b32.xlu0 %v371, 32
          %v504 = vpop.permute.xlu0 %503
          %505 = vrot.lane.b32.xlu0 %v372, 32
          %v506 = vpop.permute.xlu0 %505
          %v510 = vrot.slane %v370, 1
          %v511 = vrot.slane %v371, 1
          %v512 = vsel %vm388, %v510, %v511
          %v513 = vrot.slane %v372, 1
          %v514 = vsel %vm388, %v511, %v513
          %515 = vrot.lane.b32.xlu0 %v512, 48
          %v516 = vpop.permute.xlu0 %515
          %517 = vrot.lane.b32.xlu0 %v514, 48
          %v518 = vpop.permute.xlu0 %517
          %519 = vrot.lane.b32.xlu0 %v513, 48
          %v520 = vpop.permute.xlu0 %519
          %527 = vrot.lane.b32.xlu0 %v376, 64
          %v528 = vpop.permute.xlu0 %527
          %529 = vrot.lane.b32.xlu0 %v377, 64
          %v530 = vpop.permute.xlu0 %529
          %531 = vrot.lane.b32.xlu0 %v378, 64
          %v532 = vpop.permute.xlu0 %531
          %v536 = vrot.slane %v376, 1
          %v537 = vrot.slane %v377, 1
          %v538 = vsel %vm388, %v536, %v537
          %v539 = vrot.slane %v378, 1
          %v540 = vsel %vm388, %v537, %v539
          %541 = vrot.lane.b32.xlu0 %v538, 80
          %v542 = vpop.permute.xlu0 %541
          %543 = vrot.lane.b32.xlu0 %v540, 80
          %v544 = vpop.permute.xlu0 %543
          %545 = vrot.lane.b32.xlu0 %v539, 80
          %v546 = vpop.permute.xlu0 %545
          %553 = vrot.lane.b32.xlu0 %v382, 96
          %v554 = vpop.permute.xlu0 %553
          %555 = vrot.lane.b32.xlu0 %v383, 96
          %v556 = vpop.permute.xlu0 %555
          %557 = vrot.lane.b32.xlu0 %v384, 96
          %v558 = vpop.permute.xlu0 %557
          %v562 = vrot.slane %v382, 1
          %v563 = vrot.slane %v383, 1
          %v564 = vsel %vm388, %v562, %v563
          %v565 = vrot.slane %v384, 1
          %v566 = vsel %vm388, %v563, %v565
          %567 = vrot.lane.b32.xlu0 %v564, 112
          %v568 = vpop.permute.xlu0 %567
          %569 = vrot.lane.b32.xlu0 %v566, 112
          %v570 = vpop.permute.xlu0 %569
          %571 = vrot.lane.b32.xlu0 %v565, 112
          %v572 = vpop.permute.xlu0 %571
          %vm576 = vcmask 130048
          %v577 = vsel %vm576, %v339, %v395
          %v578 = vsel %vm576, %v340, %v397
          %v579 = vsel %vm576, %v341, %v399
          %vm580 = vcmask 261120
          %v581 = vsel %vm580, %v577, %v407
          %v582 = vsel %vm580, %v578, %v409
          %v583 = vsel %vm580, %v579, %v411
          %vm584 = vcmask 392192
          %v585 = vsel %vm584, %v581, %v421
          %v586 = vsel %vm584, %v582, %v423
          %v587 = vsel %vm584, %v583, %v425
          %vm588 = vcmask 523264
          %v589 = vsel %vm588, %v585, %v433
          %v590 = vsel %vm588, %v586, %v435
          %v591 = vsel %vm588, %v587, %v437
          %vm592 = vcmask 654336
          %v593 = vsel %vm592, %v589, %v447
          %v594 = vsel %vm592, %v590, %v449
          %v595 = vsel %vm592, %v591, %v451
          %vm596 = vcmask 785408
          %v597 = vsel %vm596, %v593, %v459
          %v598 = vsel %vm596, %v594, %v461
          %v599 = vsel %vm596, %v595, %v463
          %vm600 = vcmask 916480
          %v601 = vsel %vm600, %v597, %v473
          %v602 = vsel %vm600, %v598, %v475
          %v603 = vsel %vm600, %v599, %v477
          %v604 = vsel %vm576, %v364, %v490
          %v605 = vsel %vm576, %v365, %v492
          %v606 = vsel %vm576, %v366, %v494
          %v607 = vsel %vm580, %v604, %v502
          %v608 = vsel %vm580, %v605, %v504
          %v609 = vsel %vm580, %v606, %v506
          %v610 = vsel %vm584, %v607, %v516
          %v611 = vsel %vm584, %v608, %v518
          %v612 = vsel %vm584, %v609, %v520
          %v613 = vsel %vm588, %v610, %v528
          %v614 = vsel %vm588, %v611, %v530
          %v615 = vsel %vm588, %v612, %v532
          %v616 = vsel %vm592, %v613, %v542
          %v617 = vsel %vm592, %v614, %v544
          %v618 = vsel %vm592, %v615, %v546
          %v619 = vsel %vm596, %v616, %v554
          %v620 = vsel %vm596, %v617, %v556
          %v621 = vsel %vm596, %v618, %v558
          %v622 = vsel %vm600, %v619, %v568
          %v623 = vsel %vm600, %v620, %v570
          %v624 = vsel %vm600, %v621, %v572
          %v625 = vpack.c.bf16 %v602, %v601
          %v626 = vpack.c.bf16 %v623, %v622
          %v627 = vpack.c.bf16 %v603, %v603
          %v628 = vpack.c.bf16 %v624, %v624
          %v629 = vld [vmem:[%s1] sm:$0xf]
          %v630 = vld [vmem:[%s1 + $0x4] sm:$0xf]
          %v631 = vld [vmem:[%s1 + $0x8] sm:$0xf]
          %v632 = vld [vmem:[%s1 + $0xc] sm:$0xf]
          %v633 = vld [vmem:[%s1 + $0x10] sm:$0xf]
          %v634 = vld [vmem:[%s1 + $0x14] sm:$0xf]
          %v635 = vld [vmem:[%s1 + $0x18] sm:$0xf]
          %v636 = vld [vmem:[%s1 + $0x1c] sm:$0xf]
          %v637 = vld [vmem:[%s1 + $0x20] sm:$0xf]
          %v638 = vld [vmem:[%s1 + $0x24] sm:$0xf]
          %v639 = vld [vmem:[%s1 + $0x28] sm:$0xf]
          %v640 = vld [vmem:[%s1 + $0x2c] sm:$0xf]
          %v641 = vld [vmem:[%s1 + $0x30] sm:$0xf]
          %v642 = vld [vmem:[%s1 + $0x34] sm:$0xf]
          %v643 = vld [vmem:[%s1 + $0x38] sm:$0xf]
          %v644 = vld [vmem:[%s1 + $0x3c] sm:$0xf]
          %v645 = vld [vmem:[%s1 + $0x40] sm:$0xf]
          %v646 = vld [vmem:[%s1 + $0x44] sm:$0xf]
          %v647 = vld [vmem:[%s1 + $0x48] sm:$0xf]
          %v648 = vld [vmem:[%s1 + $0x4c] sm:$0xf]
          %v649 = vld [vmem:[%s1 + $0x50] sm:$0xf]
          %v650 = vld [vmem:[%s1 + $0x54] sm:$0xf]
          %v651 = vld [vmem:[%s1 + $0x58] sm:$0xf]
          %v652 = vld [vmem:[%s1 + $0x5c] sm:$0xf]
          %v653 = vld [vmem:[%s1 + $0x60] sm:$0xf]
          %v654 = vld [vmem:[%s1 + $0x64] sm:$0xf]
          %v655 = vld [vmem:[%s1 + $0x68] sm:$0xf]
          %v656 = vld [vmem:[%s1 + $0x6c] sm:$0xf]
          %v657 = vld [vmem:[%s1 + $0x70] sm:$0xf]
          %v658 = vld [vmem:[%s1 + $0x74] sm:$0xf]
          %v659 = vld [vmem:[%s1 + $0x78] sm:$0xf]
          %v660 = vld [vmem:[%s1 + $0x7c] sm:$0xf]
          %v661 = vld [vmem:[%s2] sm:$0x1]
          %v663 = vlaneseq
          %v664 = vshrl.u32 %v663, 7
          %v665 = vsub.s32 0, %v664
          %v666 = vrot.slane %v661, %v665
          %v700 = vunpack.c.l.b16 %v629
          %v701 = vunpack.c.l.b16 %v630
          %v702 = vunpack.c.l.b16 %v631
          %v703 = vunpack.c.l.b16 %v632
          %v704 = vunpack.c.l.b16 %v633
          %v705 = vunpack.c.l.b16 %v634
          %v706 = vunpack.c.l.b16 %v635
          %v707 = vunpack.c.l.b16 %v636
          %v708 = vunpack.c.l.b16 %v637
          %v709 = vunpack.c.l.b16 %v638
          %v710 = vunpack.c.l.b16 %v639
          %v711 = vunpack.c.l.b16 %v640
          %v712 = vunpack.c.l.b16 %v641
          %v713 = vunpack.c.l.b16 %v642
          %v714 = vunpack.c.l.b16 %v643
          %v715 = vunpack.c.l.b16 %v644
          %v716 = vunpack.c.l.b16 %v645
          %v717 = vunpack.c.l.b16 %v646
          %v718 = vunpack.c.l.b16 %v647
          %v719 = vunpack.c.l.b16 %v648
          %v720 = vunpack.c.l.b16 %v649
          %v721 = vunpack.c.l.b16 %v650
          %v722 = vunpack.c.l.b16 %v651
          %v723 = vunpack.c.l.b16 %v652
          %v724 = vunpack.c.l.b16 %v653
          %v725 = vunpack.c.l.b16 %v654
          %v726 = vunpack.c.l.b16 %v655
          %v727 = vunpack.c.l.b16 %v656
          %v728 = vunpack.c.l.b16 %v657
          %v729 = vunpack.c.l.b16 %v658
          %v730 = vunpack.c.l.b16 %v659
          %v731 = vunpack.c.l.b16 %v660
          %v732 = vpack.c.b16 %v701, %v700
          %v733 = vpack.c.b16 %v703, %v702
          %v734 = vpack.c.b16 %v705, %v704
          %v735 = vpack.c.b16 %v707, %v706
          %v736 = vpack.c.b16 %v709, %v708
          %v737 = vpack.c.b16 %v711, %v710
          %v738 = vpack.c.b16 %v713, %v712
          %v739 = vpack.c.b16 %v715, %v714
          %v740 = vpack.c.b16 %v717, %v716
          %v741 = vpack.c.b16 %v719, %v718
          %v742 = vpack.c.b16 %v721, %v720
          %v743 = vpack.c.b16 %v723, %v722
          %v744 = vpack.c.b16 %v725, %v724
          %v745 = vpack.c.b16 %v727, %v726
          %v746 = vpack.c.b16 %v729, %v728
          %v747 = vpack.c.b16 %v731, %v730
          %764 = vmatprep.subr.bf16.mxu0 0
          %765 = vmatpush1.bf16.msra.mxu0 %v739
          %766 = vmatprep.subr.bf16.mxu0 0
          %767 = vmatpush1.bf16.msra.mxu0 %v738
          %768 = vmatprep.subr.bf16.mxu0 0
          %769 = vmatpush1.bf16.msra.mxu0 %v737
          %770 = vmatprep.subr.bf16.mxu0 0
          %771 = vmatpush1.bf16.msra.mxu0 %v736
          %772 = vmatprep.subr.bf16.mxu0 0
          %773 = vmatpush1.bf16.msra.mxu0 %v735
          %774 = vmatprep.subr.bf16.mxu0 0
          %775 = vmatpush1.bf16.msra.mxu0 %v734
          %776 = vmatprep.subr.bf16.mxu0 0
          %777 = vmatpush1.bf16.msra.mxu0 %v733
          %778 = vmatprep.subr.bf16.mxu0 0
          %779 = vmatpush1.bf16.msra.mxu0 %v732
          %780 = vmatprep.subr.bf16.mxu0 0
          %781 = vmatpush2.bf16.msra.mxu0 %v747
          %782 = vmatprep.subr.bf16.mxu0 0
          %783 = vmatpush2.bf16.msra.mxu0 %v746
          %784 = vmatprep.subr.bf16.mxu0 0
          %785 = vmatpush2.bf16.msra.mxu0 %v745
          %786 = vmatprep.subr.bf16.mxu0 0
          %787 = vmatpush2.bf16.msra.mxu0 %v744
          %788 = vmatprep.subr.bf16.mxu0 0
          %789 = vmatpush2.bf16.msra.mxu0 %v743
          %790 = vmatprep.subr.bf16.mxu0 0
          %791 = vmatpush2.bf16.msra.mxu0 %v742
          %792 = vmatprep.subr.bf16.mxu0 0
          %793 = vmatpush2.bf16.msra.mxu0 %v741
          %794 = vmatprep.subr.bf16.mxu0 0
          %795 = vmatpush2.bf16.msra.mxu0 %v740
          %796 = vmatprep.mubr.bf16.mxu0 %v626
          %797 = vmatmul.mubr.bf16.gmra.mxu0 %v625
          %v798 = vpop.f32.mrf.mxu0
          %v799 = vadd.f32 %v666, %v798
          %v800 = vpop.f32.mrf.mxu0
          %v801 = vpop.f32.mrf.mxu0
          %v802 = vadd.f32 %v666, %v801
          %v803 = vpop.f32.mrf.mxu0
          %804 = vmatprep.mubr.bf16.mxu0 %v628
          %805 = vmatmul.mubr.bf16.gmra.mxu0 %v627
          %v806 = vpop.f32.mrf.mxu0
          %v807 = vadd.f32 %v666, %v806
          %v808 = vpop.f32.mrf.mxu0
          %v809 = vpop.f32.mrf.mxu0
          %v810 = vpop.f32.mrf.mxu0
          %811 = vdwg.mxu0
          %v812 = vmax.f32 %v799, 0.0
          %v813 = vmax.f32 %v802, 0.0
          %v814 = vmax.f32 %v807, 0.0
          %s815 = smul.u32 %s332, 20
          %s816 = scalar_lea.vmem [#allocation2], %s815
          %817 = vst.msk [vmem:[%s816] sm:$0xff] %vm580, %v812
          %818 = vst.msk [vmem:[%s816 + $0x8] sm:$0xff] %vm580, %v813
          %vm819 = vcmask 257024
          %820 = vst.msk [vmem:[%s816 + $0x10] sm:$0xf] %vm819, %v814
        $region61: #{cnn_encoder_forward.1} parent=55 // loop_footer
          %s336 = sadd.s32 1, %s332
        $region62: #{cnn_encoder_forward.1} parent=55 // loop_footer_branch
          %331 = sbr.rel target = $region58
        $region63: #{cnn_encoder_forward.1} parent=55 // loop_exit
          _
        loop: start=0, step=1, limit=9
        $region64: #{cnn_encoder_forward.1} parent=55 // loop_pre_header
          _
        $region65: #{cnn_encoder_forward.1} parent=55 // loop_header
          %s822 = sphi 0, %s826
          %p823 = scmp.ge.s32.totalorder %s822, 9
        $region66: #{cnn_encoder_forward.1} parent=55 // loop_header_branch
          %825 = sbr.rel (%p823) target = $region70
        $region67: #{cnn_encoder_forward.1} parent=55 // loop_body
          %s827 = smul.u32 %s822, 40
          %s828 = scalar_lea.vmem [#allocation2], %s827
          %v829 = vld [vmem:[%s828] ss:$2 sm:$0xff]
          %s830 = scalar_lea.vmem %s828, 16 [#allocation2]
          %v831 = vld [vmem:[%s830] ss:$2 sm:$0x1]
          %s832 = sadd.s32 %s827, 1
          %s833 = scalar_lea.vmem [#allocation2], %s832
          %v834 = vld [vmem:[%s833] ss:$2 sm:$0xff]
          %s835 = scalar_lea.vmem %s833, 16 [#allocation2]
          %v836 = vld [vmem:[%s835] ss:$2 sm:$0x1]
          %s837 = sadd.s32 %s827, 2
          %s838 = scalar_lea.vmem [#allocation2], %s837
          %v839 = vld [vmem:[%s838] ss:$2 sm:$0xff]
          %s840 = scalar_lea.vmem %s838, 16 [#allocation2]
          %v841 = vld [vmem:[%s840] ss:$2 sm:$0x1]
          %s842 = sadd.s32 %s827, 3
          %s843 = scalar_lea.vmem [#allocation2], %s842
          %v844 = vld [vmem:[%s843] ss:$2 sm:$0xff]
          %s845 = scalar_lea.vmem %s843, 16 [#allocation2]
          %v846 = vld [vmem:[%s845] ss:$2 sm:$0x1]
          %s847 = smul.u32 %s822, 2
          %s848 = sadd.s32 %s847, 1
          %s849 = smul.u32 %s848, 20
          %s850 = scalar_lea.vmem [#allocation2], %s849
          %v851 = vld [vmem:[%s850] ss:$2 sm:$0xff]
          %s852 = scalar_lea.vmem %s850, 16 [#allocation2]
          %v853 = vld [vmem:[%s852] ss:$2 sm:$0x1]
          %s854 = sadd.s32 %s849, 1
          %s855 = scalar_lea.vmem [#allocation2], %s854
          %v856 = vld [vmem:[%s855] ss:$2 sm:$0xff]
          %s857 = scalar_lea.vmem %s855, 16 [#allocation2]
          %v858 = vld [vmem:[%s857] ss:$2 sm:$0x1]
          %s859 = sadd.s32 %s849, 2
          %s860 = scalar_lea.vmem [#allocation2], %s859
          %v861 = vld [vmem:[%s860] ss:$2 sm:$0xff]
          %s862 = scalar_lea.vmem %s860, 16 [#allocation2]
          %v863 = vld [vmem:[%s862] ss:$2 sm:$0x1]
          %s864 = sadd.s32 %s849, 3
          %s865 = scalar_lea.vmem [#allocation2], %s864
          %v866 = vld [vmem:[%s865] ss:$2 sm:$0xff]
          %s867 = scalar_lea.vmem %s865, 16 [#allocation2]
          %v868 = vld [vmem:[%s867] ss:$2 sm:$0x1]
          %s869 = sadd.s32 %s847, 2
          %s870 = smul.u32 %s869, 20
          %s871 = scalar_lea.vmem [#allocation2], %s870
          %v872 = vld [vmem:[%s871] ss:$2 sm:$0xff]
          %s873 = scalar_lea.vmem %s871, 16 [#allocation2]
          %v874 = vld [vmem:[%s873] ss:$2 sm:$0x1]
          %s875 = sadd.s32 %s870, 1
          %s876 = scalar_lea.vmem [#allocation2], %s875
          %v877 = vld [vmem:[%s876] ss:$2 sm:$0xff]
          %s878 = scalar_lea.vmem %s876, 16 [#allocation2]
          %v879 = vld [vmem:[%s878] ss:$2 sm:$0x1]
          %s880 = sadd.s32 %s870, 2
          %s881 = scalar_lea.vmem [#allocation2], %s880
          %v882 = vld [vmem:[%s881] ss:$2 sm:$0xff]
          %s883 = scalar_lea.vmem %s881, 16 [#allocation2]
          %v884 = vld [vmem:[%s883] ss:$2 sm:$0x1]
          %s885 = sadd.s32 %s870, 3
          %s886 = scalar_lea.vmem [#allocation2], %s885
          %v887 = vld [vmem:[%s886] ss:$2 sm:$0xff]
          %s888 = scalar_lea.vmem %s886, 16 [#allocation2]
          %v889 = vld [vmem:[%s888] ss:$2 sm:$0x1]
          %s890 = sadd.s32 %s847, 3
          %s891 = smul.u32 %s890, 20
          %s892 = scalar_lea.vmem [#allocation2], %s891
          %v893 = vld [vmem:[%s892] ss:$2 sm:$0xff]
          %s894 = scalar_lea.vmem %s892, 16 [#allocation2]
          %v895 = vld [vmem:[%s894] ss:$2 sm:$0x1]
          %s896 = sadd.s32 %s891, 1
          %s897 = scalar_lea.vmem [#allocation2], %s896
          %v898 = vld [vmem:[%s897] ss:$2 sm:$0xff]
          %s899 = scalar_lea.vmem %s897, 16 [#allocation2]
          %v900 = vld [vmem:[%s899] ss:$2 sm:$0x1]
          %s901 = sadd.s32 %s891, 2
          %s902 = scalar_lea.vmem [#allocation2], %s901
          %v903 = vld [vmem:[%s902] ss:$2 sm:$0xff]
          %s904 = scalar_lea.vmem %s902, 16 [#allocation2]
          %v905 = vld [vmem:[%s904] ss:$2 sm:$0x1]
          %s906 = sadd.s32 %s891, 3
          %s907 = scalar_lea.vmem [#allocation2], %s906
          %v908 = vld [vmem:[%s907] ss:$2 sm:$0xff]
          %s909 = scalar_lea.vmem %s907, 16 [#allocation2]
          %v910 = vld [vmem:[%s909] ss:$2 sm:$0x1]
          %913 = vrot.lane.b32.xlu0 %v834, 32
          %v914 = vpop.permute.xlu0 %913
          %915 = vrot.lane.b32.xlu0 %v836, 32
          %v916 = vpop.permute.xlu0 %915
          %921 = vrot.lane.b32.xlu0 %v839, 64
          %v922 = vpop.permute.xlu0 %921
          %923 = vrot.lane.b32.xlu0 %v841, 64
          %v924 = vpop.permute.xlu0 %923
          %929 = vrot.lane.b32.xlu0 %v844, 96
          %v930 = vpop.permute.xlu0 %929
          %931 = vrot.lane.b32.xlu0 %v846, 96
          %v932 = vpop.permute.xlu0 %931
          %937 = vrot.lane.b32.xlu0 %v856, 32
          %v938 = vpop.permute.xlu0 %937
          %939 = vrot.lane.b32.xlu0 %v858, 32
          %v940 = vpop.permute.xlu0 %939
          %945 = vrot.lane.b32.xlu0 %v861, 64
          %v946 = vpop.permute.xlu0 %945
          %947 = vrot.lane.b32.xlu0 %v863, 64
          %v948 = vpop.permute.xlu0 %947
          %953 = vrot.lane.b32.xlu0 %v866, 96
          %v954 = vpop.permute.xlu0 %953
          %955 = vrot.lane.b32.xlu0 %v868, 96
          %v956 = vpop.permute.xlu0 %955
          %961 = vrot.lane.b32.xlu0 %v877, 32
          %v962 = vpop.permute.xlu0 %961
          %963 = vrot.lane.b32.xlu0 %v879, 32
          %v964 = vpop.permute.xlu0 %963
          %969 = vrot.lane.b32.xlu0 %v882, 64
          %v970 = vpop.permute.xlu0 %969
          %971 = vrot.lane.b32.xlu0 %v884, 64
          %v972 = vpop.permute.xlu0 %971
          %977 = vrot.lane.b32.xlu0 %v887, 96
          %v978 = vpop.permute.xlu0 %977
          %979 = vrot.lane.b32.xlu0 %v889, 96
          %v980 = vpop.permute.xlu0 %979
          %985 = vrot.lane.b32.xlu0 %v898, 32
          %v986 = vpop.permute.xlu0 %985
          %987 = vrot.lane.b32.xlu0 %v900, 32
          %v988 = vpop.permute.xlu0 %987
          %993 = vrot.lane.b32.xlu0 %v903, 64
          %v994 = vpop.permute.xlu0 %993
          %995 = vrot.lane.b32.xlu0 %v905, 64
          %v996 = vpop.permute.xlu0 %995
          %1001 = vrot.lane.b32.xlu0 %v908, 96
          %v1002 = vpop.permute.xlu0 %1001
          %1003 = vrot.lane.b32.xlu0 %v910, 96
          %v1004 = vpop.permute.xlu0 %1003
          %vm1007 = vcmask 261120
          %v1008 = vsel %vm1007, %v829, %v914
          %v1009 = vsel %vm1007, %v831, %v916
          %vm1010 = vcmask 523264
          %v1011 = vsel %vm1010, %v1008, %v922
          %v1012 = vsel %vm1010, %v1009, %v924
          %vm1013 = vcmask 785408
          %v1014 = vsel %vm1013, %v1011, %v930
          %v1015 = vsel %vm1013, %v1012, %v932
          %v1016 = vsel %vm1007, %v851, %v938
          %v1017 = vsel %vm1007, %v853, %v940
          %v1018 = vsel %vm1010, %v1016, %v946
          %v1019 = vsel %vm1010, %v1017, %v948
          %v1020 = vsel %vm1013, %v1018, %v954
          %v1021 = vsel %vm1013, %v1019, %v956
          %v1022 = vsel %vm1007, %v872, %v962
          %v1023 = vsel %vm1007, %v874, %v964
          %v1024 = vsel %vm1010, %v1022, %v970
          %v1025 = vsel %vm1010, %v1023, %v972
          %v1026 = vsel %vm1013, %v1024, %v978
          %v1027 = vsel %vm1013, %v1025, %v980
          %v1028 = vsel %vm1007, %v893, %v986
          %v1029 = vsel %vm1007, %v895, %v988
          %v1030 = vsel %vm1010, %v1028, %v994
          %v1031 = vsel %vm1010, %v1029, %v996
          %v1032 = vsel %vm1013, %v1030, %v1002
          %v1033 = vsel %vm1013, %v1031, %v1004
          %v1034 = vpack.c.bf16 %v1015, %v1014
          %v1035 = vpack.c.bf16 %v1021, %v1020
          %v1036 = vpack.c.bf16 %v1027, %v1026
          %v1037 = vpack.c.bf16 %v1033, %v1032
          %v1038 = vld [vmem:[%s3] sm:$0xf]
          %v1039 = vld [vmem:[%s3 + $0x4] sm:$0xf]
          %v1040 = vld [vmem:[%s3 + $0x8] sm:$0xf]
          %v1041 = vld [vmem:[%s3 + $0xc] sm:$0xf]
          %v1042 = vld [vmem:[%s3 + $0x10] sm:$0xf]
          %v1043 = vld [vmem:[%s3 + $0x14] sm:$0xf]
          %v1044 = vld [vmem:[%s3 + $0x18] sm:$0xf]
          %v1045 = vld [vmem:[%s3 + $0x1c] sm:$0xf]
          %v1046 = vld [vmem:[%s3 + $0x20] sm:$0xf]
          %v1047 = vld [vmem:[%s3 + $0x24] sm:$0xf]
          %v1048 = vld [vmem:[%s3 + $0x28] sm:$0xf]
          %v1049 = vld [vmem:[%s3 + $0x2c] sm:$0xf]
          %v1050 = vld [vmem:[%s3 + $0x30] sm:$0xf]
          %v1051 = vld [vmem:[%s3 + $0x34] sm:$0xf]
          %v1052 = vld [vmem:[%s3 + $0x38] sm:$0xf]
          %v1053 = vld [vmem:[%s3 + $0x3c] sm:$0xf]
          %v1054 = vld [vmem:[%s3 + $0x40] sm:$0xf]
          %v1055 = vld [vmem:[%s3 + $0x44] sm:$0xf]
          %v1056 = vld [vmem:[%s3 + $0x48] sm:$0xf]
          %v1057 = vld [vmem:[%s3 + $0x4c] sm:$0xf]
          %v1058 = vld [vmem:[%s3 + $0x50] sm:$0xf]
          %v1059 = vld [vmem:[%s3 + $0x54] sm:$0xf]
          %v1060 = vld [vmem:[%s3 + $0x58] sm:$0xf]
          %v1061 = vld [vmem:[%s3 + $0x5c] sm:$0xf]
          %v1062 = vld [vmem:[%s3 + $0x60] sm:$0xf]
          %v1063 = vld [vmem:[%s3 + $0x64] sm:$0xf]
          %v1064 = vld [vmem:[%s3 + $0x68] sm:$0xf]
          %v1065 = vld [vmem:[%s3 + $0x6c] sm:$0xf]
          %v1066 = vld [vmem:[%s3 + $0x70] sm:$0xf]
          %v1067 = vld [vmem:[%s3 + $0x74] sm:$0xf]
          %v1068 = vld [vmem:[%s3 + $0x78] sm:$0xf]
          %v1069 = vld [vmem:[%s3 + $0x7c] sm:$0xf]
          %v1070 = vld [vmem:[%s3 + $0x80] sm:$0xf]
          %v1071 = vld [vmem:[%s3 + $0x84] sm:$0xf]
          %v1072 = vld [vmem:[%s3 + $0x88] sm:$0xf]
          %v1073 = vld [vmem:[%s3 + $0x8c] sm:$0xf]
          %v1074 = vld [vmem:[%s3 + $0x90] sm:$0xf]
          %v1075 = vld [vmem:[%s3 + $0x94] sm:$0xf]
          %v1076 = vld [vmem:[%s3 + $0x98] sm:$0xf]
          %v1077 = vld [vmem:[%s3 + $0x9c] sm:$0xf]
          %v1078 = vld [vmem:[%s3 + $0xa0] sm:$0xf]
          %v1079 = vld [vmem:[%s3 + $0xa4] sm:$0xf]
          %v1080 = vld [vmem:[%s3 + $0xa8] sm:$0xf]
          %v1081 = vld [vmem:[%s3 + $0xac] sm:$0xf]
          %v1082 = vld [vmem:[%s3 + $0xb0] sm:$0xf]
          %v1083 = vld [vmem:[%s3 + $0xb4] sm:$0xf]
          %v1084 = vld [vmem:[%s3 + $0xb8] sm:$0xf]
          %v1085 = vld [vmem:[%s3 + $0xbc] sm:$0xf]
          %v1086 = vld [vmem:[%s3 + $0xc0] sm:$0xf]
          %v1087 = vld [vmem:[%s3 + $0xc4] sm:$0xf]
          %v1088 = vld [vmem:[%s3 + $0xc8] sm:$0xf]
          %v1089 = vld [vmem:[%s3 + $0xcc] sm:$0xf]
          %v1090 = vld [vmem:[%s3 + $0xd0] sm:$0xf]
          %v1091 = vld [vmem:[%s3 + $0xd4] sm:$0xf]
          %v1092 = vld [vmem:[%s3 + $0xd8] sm:$0xf]
          %v1093 = vld [vmem:[%s3 + $0xdc] sm:$0xf]
          %v1094 = vld [vmem:[%s3 + $0xe0] sm:$0xf]
          %v1095 = vld [vmem:[%s3 + $0xe4] sm:$0xf]
          %v1096 = vld [vmem:[%s3 + $0xe8] sm:$0xf]
          %v1097 = vld [vmem:[%s3 + $0xec] sm:$0xf]
          %v1098 = vld [vmem:[%s3 + $0xf0] sm:$0xf]
          %v1099 = vld [vmem:[%s3 + $0xf4] sm:$0xf]
          %v1100 = vld [vmem:[%s3 + $0xf8] sm:$0xf]
          %v1101 = vld [vmem:[%s3 + $0xfc] sm:$0xf]
          %v1102 = vld [vmem:[%s4] sm:$0x1]
          %v1104 = vlaneseq
          %v1105 = vshrl.u32 %v1104, 7
          %v1106 = vsub.s32 0, %v1105
          %v1107 = vrot.slane %v1102, %v1106
          %v1173 = vunpack.c.l.b16 %v1038
          %v1174 = vunpack.c.l.b16 %v1039
          %v1175 = vunpack.c.l.b16 %v1040
          %v1176 = vunpack.c.l.b16 %v1041
          %v1177 = vunpack.c.l.b16 %v1042
          %v1178 = vunpack.c.l.b16 %v1043
          %v1179 = vunpack.c.l.b16 %v1044
          %v1180 = vunpack.c.l.b16 %v1045
          %v1181 = vunpack.c.l.b16 %v1046
          %v1182 = vunpack.c.l.b16 %v1047
          %v1183 = vunpack.c.l.b16 %v1048
          %v1184 = vunpack.c.l.b16 %v1049
          %v1185 = vunpack.c.l.b16 %v1050
          %v1186 = vunpack.c.l.b16 %v1051
          %v1187 = vunpack.c.l.b16 %v1052
          %v1188 = vunpack.c.l.b16 %v1053
          %v1189 = vunpack.c.l.b16 %v1054
          %v1190 = vunpack.c.l.b16 %v1055
          %v1191 = vunpack.c.l.b16 %v1056
          %v1192 = vunpack.c.l.b16 %v1057
          %v1193 = vunpack.c.l.b16 %v1058
          %v1194 = vunpack.c.l.b16 %v1059
          %v1195 = vunpack.c.l.b16 %v1060
          %v1196 = vunpack.c.l.b16 %v1061
          %v1197 = vunpack.c.l.b16 %v1062
          %v1198 = vunpack.c.l.b16 %v1063
          %v1199 = vunpack.c.l.b16 %v1064
          %v1200 = vunpack.c.l.b16 %v1065
          %v1201 = vunpack.c.l.b16 %v1066
          %v1202 = vunpack.c.l.b16 %v1067
          %v1203 = vunpack.c.l.b16 %v1068
          %v1204 = vunpack.c.l.b16 %v1069
          %v1205 = vunpack.c.l.b16 %v1070
          %v1206 = vunpack.c.l.b16 %v1071
          %v1207 = vunpack.c.l.b16 %v1072
          %v1208 = vunpack.c.l.b16 %v1073
          %v1209 = vunpack.c.l.b16 %v1074
          %v1210 = vunpack.c.l.b16 %v1075
          %v1211 = vunpack.c.l.b16 %v1076
          %v1212 = vunpack.c.l.b16 %v1077
          %v1213 = vunpack.c.l.b16 %v1078
          %v1214 = vunpack.c.l.b16 %v1079
          %v1215 = vunpack.c.l.b16 %v1080
          %v1216 = vunpack.c.l.b16 %v1081
          %v1217 = vunpack.c.l.b16 %v1082
          %v1218 = vunpack.c.l.b16 %v1083
          %v1219 = vunpack.c.l.b16 %v1084
          %v1220 = vunpack.c.l.b16 %v1085
          %v1221 = vunpack.c.l.b16 %v1086
          %v1222 = vunpack.c.l.b16 %v1087
          %v1223 = vunpack.c.l.b16 %v1088
          %v1224 = vunpack.c.l.b16 %v1089
          %v1225 = vunpack.c.l.b16 %v1090
          %v1226 = vunpack.c.l.b16 %v1091
          %v1227 = vunpack.c.l.b16 %v1092
          %v1228 = vunpack.c.l.b16 %v1093
          %v1229 = vunpack.c.l.b16 %v1094
          %v1230 = vunpack.c.l.b16 %v1095
          %v1231 = vunpack.c.l.b16 %v1096
          %v1232 = vunpack.c.l.b16 %v1097
          %v1233 = vunpack.c.l.b16 %v1098
          %v1234 = vunpack.c.l.b16 %v1099
          %v1235 = vunpack.c.l.b16 %v1100
          %v1236 = vunpack.c.l.b16 %v1101
          %v1237 = vpack.c.b16 %v1174, %v1173
          %v1238 = vpack.c.b16 %v1176, %v1175
          %v1239 = vpack.c.b16 %v1178, %v1177
          %v1240 = vpack.c.b16 %v1180, %v1179
          %v1241 = vpack.c.b16 %v1182, %v1181
          %v1242 = vpack.c.b16 %v1184, %v1183
          %v1243 = vpack.c.b16 %v1186, %v1185
          %v1244 = vpack.c.b16 %v1188, %v1187
          %v1245 = vpack.c.b16 %v1190, %v1189
          %v1246 = vpack.c.b16 %v1192, %v1191
          %v1247 = vpack.c.b16 %v1194, %v1193
          %v1248 = vpack.c.b16 %v1196, %v1195
          %v1249 = vpack.c.b16 %v1198, %v1197
          %v1250 = vpack.c.b16 %v1200, %v1199
          %v1251 = vpack.c.b16 %v1202, %v1201
          %v1252 = vpack.c.b16 %v1204, %v1203
          %v1253 = vpack.c.b16 %v1206, %v1205
          %v1254 = vpack.c.b16 %v1208, %v1207
          %v1255 = vpack.c.b16 %v1210, %v1209
          %v1256 = vpack.c.b16 %v1212, %v1211
          %v1257 = vpack.c.b16 %v1214, %v1213
          %v1258 = vpack.c.b16 %v1216, %v1215
          %v1259 = vpack.c.b16 %v1218, %v1217
          %v1260 = vpack.c.b16 %v1220, %v1219
          %v1261 = vpack.c.b16 %v1222, %v1221
          %v1262 = vpack.c.b16 %v1224, %v1223
          %v1263 = vpack.c.b16 %v1226, %v1225
          %v1264 = vpack.c.b16 %v1228, %v1227
          %v1265 = vpack.c.b16 %v1230, %v1229
          %v1266 = vpack.c.b16 %v1232, %v1231
          %v1267 = vpack.c.b16 %v1234, %v1233
          %v1268 = vpack.c.b16 %v1236, %v1235
          %1301 = vmatprep.subr.bf16.mxu0 0
          %1302 = vmatpush1.bf16.msra.mxu0 %v1244
          %1303 = vmatprep.subr.bf16.mxu0 0
          %1304 = vmatpush1.bf16.msra.mxu0 %v1243
          %1305 = vmatprep.subr.bf16.mxu0 0
          %1306 = vmatpush1.bf16.msra.mxu0 %v1242
          %1307 = vmatprep.subr.bf16.mxu0 0
          %1308 = vmatpush1.bf16.msra.mxu0 %v1241
          %1309 = vmatprep.subr.bf16.mxu0 0
          %1310 = vmatpush1.bf16.msra.mxu0 %v1240
          %1311 = vmatprep.subr.bf16.mxu0 0
          %1312 = vmatpush1.bf16.msra.mxu0 %v1239
          %1313 = vmatprep.subr.bf16.mxu0 0
          %1314 = vmatpush1.bf16.msra.mxu0 %v1238
          %1315 = vmatprep.subr.bf16.mxu0 0
          %1316 = vmatpush1.bf16.msra.mxu0 %v1237
          %1317 = vmatprep.subr.bf16.mxu0 0
          %1318 = vmatpush2.bf16.msra.mxu0 %v1252
          %1319 = vmatprep.subr.bf16.mxu0 0
          %1320 = vmatpush2.bf16.msra.mxu0 %v1251
          %1321 = vmatprep.subr.bf16.mxu0 0
          %1322 = vmatpush2.bf16.msra.mxu0 %v1250
          %1323 = vmatprep.subr.bf16.mxu0 0
          %1324 = vmatpush2.bf16.msra.mxu0 %v1249
          %1325 = vmatprep.subr.bf16.mxu0 0
          %1326 = vmatpush2.bf16.msra.mxu0 %v1248
          %1327 = vmatprep.subr.bf16.mxu0 0
          %1328 = vmatpush2.bf16.msra.mxu0 %v1247
          %1329 = vmatprep.subr.bf16.mxu0 0
          %1330 = vmatpush2.bf16.msra.mxu0 %v1246
          %1331 = vmatprep.subr.bf16.mxu0 0
          %1332 = vmatpush2.bf16.msra.mxu0 %v1245
          %1333 = vmatprep.mubr.bf16.mxu0 %v1035
          %1334 = vmatmul.mubr.bf16.gmra.mxu0 %v1034
          %v1335 = vpop.f32.mrf.mxu0
          %v1336 = vadd.f32 %v1107, %v1335
          %v1337 = vpop.f32.mrf.mxu0
          %v1338 = vpop.f32.mrf.mxu0
          %v1339 = vadd.f32 %v1107, %v1338
          %v1340 = vpop.f32.mrf.mxu0
          %1341 = vdwg.mxu0
          %1342 = vmatprep.subr.bf16.mxu0 0
          %1343 = vmatpush1.bf16.msra.mxu0 %v1260
          %1344 = vmatprep.subr.bf16.mxu0 0
          %1345 = vmatpush1.bf16.msra.mxu0 %v1259
          %1346 = vmatprep.subr.bf16.mxu0 0
          %1347 = vmatpush1.bf16.msra.mxu0 %v1258
          %1348 = vmatprep.subr.bf16.mxu0 0
          %1349 = vmatpush1.bf16.msra.mxu0 %v1257
          %1350 = vmatprep.subr.bf16.mxu0 0
          %1351 = vmatpush1.bf16.msra.mxu0 %v1256
          %1352 = vmatprep.subr.bf16.mxu0 0
          %1353 = vmatpush1.bf16.msra.mxu0 %v1255
          %1354 = vmatprep.subr.bf16.mxu0 0
          %1355 = vmatpush1.bf16.msra.mxu0 %v1254
          %1356 = vmatprep.subr.bf16.mxu0 0
          %1357 = vmatpush1.bf16.msra.mxu0 %v1253
          %1358 = vmatprep.subr.bf16.mxu0 0
          %1359 = vmatpush2.bf16.msra.mxu0 %v1268
          %1360 = vmatprep.subr.bf16.mxu0 0
          %1361 = vmatpush2.bf16.msra.mxu0 %v1267
          %1362 = vmatprep.subr.bf16.mxu0 0
          %1363 = vmatpush2.bf16.msra.mxu0 %v1266
          %1364 = vmatprep.subr.bf16.mxu0 0
          %1365 = vmatpush2.bf16.msra.mxu0 %v1265
          %1366 = vmatprep.subr.bf16.mxu0 0
          %1367 = vmatpush2.bf16.msra.mxu0 %v1264
          %1368 = vmatprep.subr.bf16.mxu0 0
          %1369 = vmatpush2.bf16.msra.mxu0 %v1263
          %1370 = vmatprep.subr.bf16.mxu0 0
          %1371 = vmatpush2.bf16.msra.mxu0 %v1262
          %1372 = vmatprep.subr.bf16.mxu0 0
          %1373 = vmatpush2.bf16.msra.mxu0 %v1261
          %1374 = vmatprep.mubr.bf16.mxu0 %v1037
          %1375 = vmatmul.mubr.bf16.gmra.mxu0 %v1036
          %v1376 = vpop.f32.mrf.mxu0
          %v1377 = vadd.f32 %v1336, %v1376
          %v1378 = vpop.f32.mrf.mxu0
          %v1379 = vpop.f32.mrf.mxu0
          %v1380 = vadd.f32 %v1339, %v1379
          %v1381 = vpop.f32.mrf.mxu0
          %1382 = vdwg.mxu0
          %v1383 = vmax.f32 %v1377, 0.0
          %v1384 = vmax.f32 %v1380, 0.0
          %s1385 = smul.u32 %s822, 9
          %s1386 = scalar_lea.vmem [#allocation3], %s1385
          %1387 = vst.msk [vmem:[%s1386] sm:$0xff] %vm1010, %v1383
          %vm1388 = vcmask 516096
          %1389 = vst.msk [vmem:[%s1386 + $0x8] sm:$0x1] %vm1388, %v1384
        $region68: #{cnn_encoder_forward.1} parent=55 // loop_footer
          %s826 = sadd.s32 1, %s822
        $region69: #{cnn_encoder_forward.1} parent=55 // loop_footer_branch
          %821 = sbr.rel target = $region65
        $region70: #{cnn_encoder_forward.1} parent=55 // loop_exit
          _
        loop: start=0, step=1, limit=7
        $region71: #{cnn_encoder_forward.1} parent=55 // loop_pre_header
          _
        $region72: #{cnn_encoder_forward.1} parent=55 // loop_header
          %s1391 = sphi 0, %s1395
          %p1392 = scmp.ge.s32.totalorder %s1391, 7
        $region73: #{cnn_encoder_forward.1} parent=55 // loop_header_branch
          %1394 = sbr.rel (%p1392) target = $region77
        $region74: #{cnn_encoder_forward.1} parent=55 // loop_body
          %s1396 = smul.u32 %s1391, 9
          %s1397 = scalar_lea.vmem [#allocation3], %s1396
          %v1398 = vld [vmem:[%s1397] sm:$0xff]
          %v1399 = vld [vmem:[%s1397 + $0x8] sm:$0x1]
          %s1400 = sadd.s32 %s1391, 1
          %s1401 = smul.u32 %s1400, 9
          %s1402 = scalar_lea.vmem [#allocation3], %s1401
          %v1403 = vld [vmem:[%s1402] sm:$0xff]
          %v1404 = vld [vmem:[%s1402 + $0x8] sm:$0x1]
          %s1405 = sadd.s32 %s1391, 2
          %s1406 = smul.u32 %s1405, 9
          %s1407 = scalar_lea.vmem [#allocation3], %s1406
          %v1408 = vld [vmem:[%s1407] sm:$0xff]
          %v1409 = vld [vmem:[%s1407 + $0x8] sm:$0x1]
          %v1411 = vrot.slane %v1398, 1
          %1412 = vrot.lane.b32.xlu0 %v1411, 64
          %v1413 = vpop.permute.xlu0 %1412
          %vm1416 = vcmask 1045504
          %v1417 = vrot.slane %v1398, 2
          %v1418 = vrot.slane %v1399, 2
          %v1419 = vsel %vm1416, %v1417, %v1418
          %1422 = vrot.lane.b32.xlu0 %v1403, 64
          %v1423 = vpop.permute.xlu0 %1422
          %v1425 = vrot.slane %v1403, 1
          %v1428 = vrot.slane %v1403, 2
          %v1429 = vrot.slane %v1404, 2
          %v1430 = vsel %vm1416, %v1428, %v1429
          %1431 = vrot.lane.b32.xlu0 %v1430, 64
          %v1432 = vpop.permute.xlu0 %1431
          %v1435 = vrot.slane %v1408, 1
          %1436 = vrot.lane.b32.xlu0 %v1435, 64
          %v1437 = vpop.permute.xlu0 %1436
          %v1440 = vrot.slane %v1408, 2
          %v1441 = vrot.slane %v1409, 2
          %v1442 = vsel %vm1416, %v1440, %v1441
          %vm1444 = vcmask 523264
          %v1445 = vsel %vm1444, %v1398, %v1413
          %v1446 = vsel %vm1444, %v1419, %v1423
          %v1447 = vsel %vm1444, %v1425, %v1432
          %v1448 = vsel %vm1444, %v1408, %v1437
          %v1449 = vpack.c.bf16 %v1445, %v1445
          %v1450 = vpack.c.bf16 %v1446, %v1446
          %v1451 = vpack.c.bf16 %v1447, %v1447
          %v1452 = vpack.c.bf16 %v1448, %v1448
          %v1453 = vpack.c.bf16 %v1442, %v1442
          %v1454 = vld [vmem:[%s5] sm:$0xf]
          %v1455 = vld [vmem:[%s5 + $0x4] sm:$0xf]
          %v1456 = vld [vmem:[%s5 + $0x8] sm:$0xf]
          %v1457 = vld [vmem:[%s5 + $0xc] sm:$0xf]
          %v1458 = vld [vmem:[%s5 + $0x10] sm:$0xf]
          %v1459 = vld [vmem:[%s5 + $0x14] sm:$0xf]
          %v1460 = vld [vmem:[%s5 + $0x18] sm:$0xf]
          %v1461 = vld [vmem:[%s5 + $0x1c] sm:$0xf]
          %v1462 = vld [vmem:[%s5 + $0x20] sm:$0xf]
          %v1463 = vld [vmem:[%s5 + $0x24] sm:$0xf]
          %v1464 = vld [vmem:[%s5 + $0x28] sm:$0xf]
          %v1465 = vld [vmem:[%s5 + $0x2c] sm:$0xf]
          %v1466 = vld [vmem:[%s5 + $0x30] sm:$0xf]
          %v1467 = vld [vmem:[%s5 + $0x34] sm:$0xf]
          %v1468 = vld [vmem:[%s5 + $0x38] sm:$0xf]
          %v1469 = vld [vmem:[%s5 + $0x3c] sm:$0xf]
          %v1470 = vld [vmem:[%s5 + $0x40] sm:$0xf]
          %v1471 = vld [vmem:[%s5 + $0x44] sm:$0xf]
          %v1472 = vld [vmem:[%s5 + $0x48] sm:$0xf]
          %v1473 = vld [vmem:[%s5 + $0x4c] sm:$0xf]
          %v1474 = vld [vmem:[%s5 + $0x50] sm:$0xf]
          %v1475 = vld [vmem:[%s5 + $0x54] sm:$0xf]
          %v1476 = vld [vmem:[%s5 + $0x58] sm:$0xf]
          %v1477 = vld [vmem:[%s5 + $0x5c] sm:$0xf]
          %v1478 = vld [vmem:[%s5 + $0x60] sm:$0xf]
          %v1479 = vld [vmem:[%s5 + $0x64] sm:$0xf]
          %v1480 = vld [vmem:[%s5 + $0x68] sm:$0xf]
          %v1481 = vld [vmem:[%s5 + $0x6c] sm:$0xf]
          %v1482 = vld [vmem:[%s5 + $0x70] sm:$0xf]
          %v1483 = vld [vmem:[%s5 + $0x74] sm:$0xf]
          %v1484 = vld [vmem:[%s5 + $0x78] sm:$0xf]
          %v1485 = vld [vmem:[%s5 + $0x7c] sm:$0xf]
          %v1486 = vld [vmem:[%s5 + $0x80] sm:$0xf]
          %v1487 = vld [vmem:[%s5 + $0x84] sm:$0xf]
          %v1488 = vld [vmem:[%s5 + $0x88] sm:$0xf]
          %v1489 = vld [vmem:[%s5 + $0x8c] sm:$0xf]
          %v1490 = vld [vmem:[%s5 + $0x90] sm:$0xf]
          %v1491 = vld [vmem:[%s5 + $0x94] sm:$0xf]
          %v1492 = vld [vmem:[%s5 + $0x98] sm:$0xf]
          %v1493 = vld [vmem:[%s5 + $0x9c] sm:$0xf]
          %v1494 = vld [vmem:[%s5 + $0xa0] sm:$0xf]
          %v1495 = vld [vmem:[%s5 + $0xa4] sm:$0xf]
          %v1496 = vld [vmem:[%s5 + $0xa8] sm:$0xf]
          %v1497 = vld [vmem:[%s5 + $0xac] sm:$0xf]
          %v1498 = vld [vmem:[%s5 + $0xb0] sm:$0xf]
          %v1499 = vld [vmem:[%s5 + $0xb4] sm:$0xf]
          %v1500 = vld [vmem:[%s5 + $0xb8] sm:$0xf]
          %v1501 = vld [vmem:[%s5 + $0xbc] sm:$0xf]
          %v1502 = vld [vmem:[%s5 + $0xc0] sm:$0xf]
          %v1503 = vld [vmem:[%s5 + $0xc4] sm:$0xf]
          %v1504 = vld [vmem:[%s5 + $0xc8] sm:$0xf]
          %v1505 = vld [vmem:[%s5 + $0xcc] sm:$0xf]
          %v1506 = vld [vmem:[%s5 + $0xd0] sm:$0xf]
          %v1507 = vld [vmem:[%s5 + $0xd4] sm:$0xf]
          %v1508 = vld [vmem:[%s5 + $0xd8] sm:$0xf]
          %v1509 = vld [vmem:[%s5 + $0xdc] sm:$0xf]
          %v1510 = vld [vmem:[%s5 + $0xe0] sm:$0xf]
          %v1511 = vld [vmem:[%s5 + $0xe4] sm:$0xf]
          %v1512 = vld [vmem:[%s5 + $0xe8] sm:$0xf]
          %v1513 = vld [vmem:[%s5 + $0xec] sm:$0xf]
          %v1514 = vld [vmem:[%s5 + $0xf0] sm:$0xf]
          %v1515 = vld [vmem:[%s5 + $0xf4] sm:$0xf]
          %v1516 = vld [vmem:[%s5 + $0xf8] sm:$0xf]
          %v1517 = vld [vmem:[%s5 + $0xfc] sm:$0xf]
          %v1518 = vld [vmem:[%s5 + $0x100] sm:$0xf]
          %v1519 = vld [vmem:[%s5 + $0x104] sm:$0xf]
          %v1520 = vld [vmem:[%s5 + $0x108] sm:$0xf]
          %v1521 = vld [vmem:[%s5 + $0x10c] sm:$0xf]
          %v1522 = vld [vmem:[%s5 + $0x110] sm:$0xf]
          %v1523 = vld [vmem:[%s5 + $0x114] sm:$0xf]
          %v1524 = vld [vmem:[%s5 + $0x118] sm:$0xf]
          %v1525 = vld [vmem:[%s5 + $0x11c] sm:$0xf]
          %v1526 = vld [vmem:[%s6] sm:$0x1]
          %v1528 = vlaneseq
          %v1529 = vshrl.u32 %v1528, 7
          %v1530 = vsub.s32 0, %v1529
          %v1531 = vrot.slane %v1526, %v1530
          %v1605 = vunpack.c.l.b16 %v1454
          %v1606 = vunpack.c.l.b16 %v1455
          %v1607 = vunpack.c.l.b16 %v1456
          %v1608 = vunpack.c.l.b16 %v1457
          %v1609 = vunpack.c.l.b16 %v1458
          %v1610 = vunpack.c.l.b16 %v1459
          %v1611 = vunpack.c.l.b16 %v1460
          %v1612 = vunpack.c.l.b16 %v1461
          %v1613 = vunpack.c.l.b16 %v1462
          %v1614 = vunpack.c.l.b16 %v1463
          %v1615 = vunpack.c.l.b16 %v1464
          %v1616 = vunpack.c.l.b16 %v1465
          %v1617 = vunpack.c.l.b16 %v1466
          %v1618 = vunpack.c.l.b16 %v1467
          %v1619 = vunpack.c.l.b16 %v1468
          %v1620 = vunpack.c.l.b16 %v1469
          %v1621 = vunpack.c.l.b16 %v1470
          %v1622 = vunpack.c.l.b16 %v1471
          %v1623 = vunpack.c.l.b16 %v1472
          %v1624 = vunpack.c.l.b16 %v1473
          %v1625 = vunpack.c.l.b16 %v1474
          %v1626 = vunpack.c.l.b16 %v1475
          %v1627 = vunpack.c.l.b16 %v1476
          %v1628 = vunpack.c.l.b16 %v1477
          %v1629 = vunpack.c.l.b16 %v1478
          %v1630 = vunpack.c.l.b16 %v1479
          %v1631 = vunpack.c.l.b16 %v1480
          %v1632 = vunpack.c.l.b16 %v1481
          %v1633 = vunpack.c.l.b16 %v1482
          %v1634 = vunpack.c.l.b16 %v1483
          %v1635 = vunpack.c.l.b16 %v1484
          %v1636 = vunpack.c.l.b16 %v1485
          %v1637 = vunpack.c.l.b16 %v1486
          %v1638 = vunpack.c.l.b16 %v1487
          %v1639 = vunpack.c.l.b16 %v1488
          %v1640 = vunpack.c.l.b16 %v1489
          %v1641 = vunpack.c.l.b16 %v1490
          %v1642 = vunpack.c.l.b16 %v1491
          %v1643 = vunpack.c.l.b16 %v1492
          %v1644 = vunpack.c.l.b16 %v1493
          %v1645 = vunpack.c.l.b16 %v1494
          %v1646 = vunpack.c.l.b16 %v1495
          %v1647 = vunpack.c.l.b16 %v1496
          %v1648 = vunpack.c.l.b16 %v1497
          %v1649 = vunpack.c.l.b16 %v1498
          %v1650 = vunpack.c.l.b16 %v1499
          %v1651 = vunpack.c.l.b16 %v1500
          %v1652 = vunpack.c.l.b16 %v1501
          %v1653 = vunpack.c.l.b16 %v1502
          %v1654 = vunpack.c.l.b16 %v1503
          %v1655 = vunpack.c.l.b16 %v1504
          %v1656 = vunpack.c.l.b16 %v1505
          %v1657 = vunpack.c.l.b16 %v1506
          %v1658 = vunpack.c.l.b16 %v1507
          %v1659 = vunpack.c.l.b16 %v1508
          %v1660 = vunpack.c.l.b16 %v1509
          %v1661 = vunpack.c.l.b16 %v1510
          %v1662 = vunpack.c.l.b16 %v1511
          %v1663 = vunpack.c.l.b16 %v1512
          %v1664 = vunpack.c.l.b16 %v1513
          %v1665 = vunpack.c.l.b16 %v1514
          %v1666 = vunpack.c.l.b16 %v1515
          %v1667 = vunpack.c.l.b16 %v1516
          %v1668 = vunpack.c.l.b16 %v1517
          %v1669 = vunpack.c.l.b16 %v1518
          %v1670 = vunpack.c.l.b16 %v1519
          %v1671 = vunpack.c.l.b16 %v1520
          %v1672 = vunpack.c.l.b16 %v1521
          %v1673 = vunpack.c.l.b16 %v1522
          %v1674 = vunpack.c.l.b16 %v1523
          %v1675 = vunpack.c.l.b16 %v1524
          %v1676 = vunpack.c.l.b16 %v1525
          %v1677 = vpack.c.b16 %v1606, %v1605
          %v1678 = vpack.c.b16 %v1608, %v1607
          %v1679 = vpack.c.b16 %v1610, %v1609
          %v1680 = vpack.c.b16 %v1612, %v1611
          %v1681 = vpack.c.b16 %v1614, %v1613
          %v1682 = vpack.c.b16 %v1616, %v1615
          %v1683 = vpack.c.b16 %v1618, %v1617
          %v1684 = vpack.c.b16 %v1620, %v1619
          %v1685 = vpack.c.b16 %v1622, %v1621
          %v1686 = vpack.c.b16 %v1624, %v1623
          %v1687 = vpack.c.b16 %v1626, %v1625
          %v1688 = vpack.c.b16 %v1628, %v1627
          %v1689 = vpack.c.b16 %v1630, %v1629
          %v1690 = vpack.c.b16 %v1632, %v1631
          %v1691 = vpack.c.b16 %v1634, %v1633
          %v1692 = vpack.c.b16 %v1636, %v1635
          %v1693 = vpack.c.b16 %v1638, %v1637
          %v1694 = vpack.c.b16 %v1640, %v1639
          %v1695 = vpack.c.b16 %v1642, %v1641
          %v1696 = vpack.c.b16 %v1644, %v1643
          %v1697 = vpack.c.b16 %v1646, %v1645
          %v1698 = vpack.c.b16 %v1648, %v1647
          %v1699 = vpack.c.b16 %v1650, %v1649
          %v1700 = vpack.c.b16 %v1652, %v1651
          %v1701 = vpack.c.b16 %v1654, %v1653
          %v1702 = vpack.c.b16 %v1656, %v1655
          %v1703 = vpack.c.b16 %v1658, %v1657
          %v1704 = vpack.c.b16 %v1660, %v1659
          %v1705 = vpack.c.b16 %v1662, %v1661
          %v1706 = vpack.c.b16 %v1664, %v1663
          %v1707 = vpack.c.b16 %v1666, %v1665
          %v1708 = vpack.c.b16 %v1668, %v1667
          %v1709 = vpack.c.b16 %v1670, %v1669
          %v1710 = vpack.c.b16 %v1672, %v1671
          %v1711 = vpack.c.b16 %v1674, %v1673
          %v1712 = vpack.c.b16 %v1676, %v1675
          %v1750 = vsel %vm1444, %v1453, 0
          %1752 = vmatprep.subr.bf16.mxu0 0
          %1753 = vmatpush1.bf16.msra.mxu0 %v1684
          %1754 = vmatprep.subr.bf16.mxu0 0
          %1755 = vmatpush1.bf16.msra.mxu0 %v1683
          %1756 = vmatprep.subr.bf16.mxu0 0
          %1757 = vmatpush1.bf16.msra.mxu0 %v1682
          %1758 = vmatprep.subr.bf16.mxu0 0
          %1759 = vmatpush1.bf16.msra.mxu0 %v1681
          %1760 = vmatprep.subr.bf16.mxu0 0
          %1761 = vmatpush1.bf16.msra.mxu0 %v1680
          %1762 = vmatprep.subr.bf16.mxu0 0
          %1763 = vmatpush1.bf16.msra.mxu0 %v1679
          %1764 = vmatprep.subr.bf16.mxu0 0
          %1765 = vmatpush1.bf16.msra.mxu0 %v1678
          %1766 = vmatprep.subr.bf16.mxu0 0
          %1767 = vmatpush1.bf16.msra.mxu0 %v1677
          %1768 = vmatprep.subr.bf16.mxu0 0
          %1769 = vmatpush2.bf16.msra.mxu0 %v1692
          %1770 = vmatprep.subr.bf16.mxu0 0
          %1771 = vmatpush2.bf16.msra.mxu0 %v1691
          %1772 = vmatprep.subr.bf16.mxu0 0
          %1773 = vmatpush2.bf16.msra.mxu0 %v1690
          %1774 = vmatprep.subr.bf16.mxu0 0
          %1775 = vmatpush2.bf16.msra.mxu0 %v1689
          %1776 = vmatprep.subr.bf16.mxu0 0
          %1777 = vmatpush2.bf16.msra.mxu0 %v1688
          %1778 = vmatprep.subr.bf16.mxu0 0
          %1779 = vmatpush2.bf16.msra.mxu0 %v1687
          %1780 = vmatprep.subr.bf16.mxu0 0
          %1781 = vmatpush2.bf16.msra.mxu0 %v1686
          %1782 = vmatprep.subr.bf16.mxu0 0
          %1783 = vmatpush2.bf16.msra.mxu0 %v1685
          %1784 = vmatprep.mubr.bf16.mxu0 %v1450
          %1785 = vmatmul.mubr.bf16.gmra.mxu0 %v1449
          %v1786 = vpop.f32.mrf.mxu0
          %v1787 = vadd.f32 %v1531, %v1786
          %v1788 = vpop.f32.mrf.mxu0
          %v1789 = vpop.f32.mrf.mxu0
          %v1790 = vpop.f32.mrf.mxu0
          %1791 = vdwg.mxu0
          %1792 = vmatprep.subr.bf16.mxu0 0
          %1793 = vmatpush1.bf16.msra.mxu0 %v1700
          %1794 = vmatprep.subr.bf16.mxu0 0
          %1795 = vmatpush1.bf16.msra.mxu0 %v1699
          %1796 = vmatprep.subr.bf16.mxu0 0
          %1797 = vmatpush1.bf16.msra.mxu0 %v1698
          %1798 = vmatprep.subr.bf16.mxu0 0
          %1799 = vmatpush1.bf16.msra.mxu0 %v1697
          %1800 = vmatprep.subr.bf16.mxu0 0
          %1801 = vmatpush1.bf16.msra.mxu0 %v1696
          %1802 = vmatprep.subr.bf16.mxu0 0
          %1803 = vmatpush1.bf16.msra.mxu0 %v1695
          %1804 = vmatprep.subr.bf16.mxu0 0
          %1805 = vmatpush1.bf16.msra.mxu0 %v1694
          %1806 = vmatprep.subr.bf16.mxu0 0
          %1807 = vmatpush1.bf16.msra.mxu0 %v1693
          %1808 = vmatprep.subr.bf16.mxu0 0
          %1809 = vmatpush2.bf16.msra.mxu0 %v1708
          %1810 = vmatprep.subr.bf16.mxu0 0
          %1811 = vmatpush2.bf16.msra.mxu0 %v1707
          %1812 = vmatprep.subr.bf16.mxu0 0
          %1813 = vmatpush2.bf16.msra.mxu0 %v1706
          %1814 = vmatprep.subr.bf16.mxu0 0
          %1815 = vmatpush2.bf16.msra.mxu0 %v1705
          %1816 = vmatprep.subr.bf16.mxu0 0
          %1817 = vmatpush2.bf16.msra.mxu0 %v1704
          %1818 = vmatprep.subr.bf16.mxu0 0
          %1819 = vmatpush2.bf16.msra.mxu0 %v1703
          %1820 = vmatprep.subr.bf16.mxu0 0
          %1821 = vmatpush2.bf16.msra.mxu0 %v1702
          %1822 = vmatprep.subr.bf16.mxu0 0
          %1823 = vmatpush2.bf16.msra.mxu0 %v1701
          %1824 = vmatprep.mubr.bf16.mxu0 %v1452
          %1825 = vmatmul.mubr.bf16.gmra.mxu0 %v1451
          %v1826 = vpop.f32.mrf.mxu0
          %v1827 = vadd.f32 %v1787, %v1826
          %v1828 = vpop.f32.mrf.mxu0
          %v1829 = vpop.f32.mrf.mxu0
          %v1830 = vpop.f32.mrf.mxu0
          %1831 = vdwg.mxu0
          %1832 = vmatprep.subr.bf16.mxu0 0
          %1833 = vmatpush1.bf16.msra.mxu0 0
          %1834 = vmatprep.subr.bf16.mxu0 0
          %1835 = vmatpush1.bf16.msra.mxu0 0
          %1836 = vmatprep.subr.bf16.mxu0 0
          %1837 = vmatpush1.bf16.msra.mxu0 0
          %1838 = vmatprep.subr.bf16.mxu0 0
          %1839 = vmatpush1.bf16.msra.mxu0 0
          %1840 = vmatprep.subr.bf16.mxu0 0
          %1841 = vmatpush1.bf16.msra.mxu0 %v1712
          %1842 = vmatprep.subr.bf16.mxu0 0
          %1843 = vmatpush1.bf16.msra.mxu0 %v1711
          %1844 = vmatprep.subr.bf16.mxu0 0
          %1845 = vmatpush1.bf16.msra.mxu0 %v1710
          %1846 = vmatprep.subr.bf16.mxu0 0
          %1847 = vmatpush1.bf16.msra.mxu0 %v1709
          %1848 = vmatprep.subr.bf16.mxu0 0
          %1849 = vmatpush2.bf16.msra.mxu0 0
          %1850 = vmatprep.subr.bf16.mxu0 0
          %1851 = vmatpush2.bf16.msra.mxu0 0
          %1852 = vmatprep.subr.bf16.mxu0 0
          %1853 = vmatpush2.bf16.msra.mxu0 0
          %1854 = vmatprep.subr.bf16.mxu0 0
          %1855 = vmatpush2.bf16.msra.mxu0 0
          %1856 = vmatprep.subr.bf16.mxu0 0
          %1857 = vmatpush2.bf16.msra.mxu0 0
          %1858 = vmatprep.subr.bf16.mxu0 0
          %1859 = vmatpush2.bf16.msra.mxu0 0
          %1860 = vmatprep.subr.bf16.mxu0 0
          %1861 = vmatpush2.bf16.msra.mxu0 0
          %1862 = vmatprep.subr.bf16.mxu0 0
          %1863 = vmatpush2.bf16.msra.mxu0 0
          %1864 = vmatprep.mubr.bf16.mxu0 0
          %1865 = vmatmul.mubr.bf16.gmra.mxu0 %v1750
          %v1866 = vpop.f32.mrf.mxu0
          %v1867 = vadd.f32 %v1827, %v1866
          %v1868 = vpop.f32.mrf.mxu0
          %v1869 = vpop.f32.mrf.mxu0
          %v1870 = vpop.f32.mrf.mxu0
          %1871 = vdwg.mxu0
          %v1872 = vmax.f32 %v1867, 0.0
          %s1873 = smul.u32 %s1391, 7
          %s1874 = scalar_lea.vmem [#allocation4], %s1873
          %vm1875 = vcmask 522240
          %1876 = vst.msk [vmem:[%s1874] sm:$0x7f] %vm1875, %v1872
        $region75: #{cnn_encoder_forward.1} parent=55 // loop_footer
          %s1395 = sadd.s32 1, %s1391
        $region76: #{cnn_encoder_forward.1} parent=55 // loop_footer_branch
          %1390 = sbr.rel target = $region72
        $region77: #{cnn_encoder_forward.1} parent=55 // loop_exit
          _
        loop: start=0, step=1, limit=49
        $region78: #{cnn_encoder_forward.1} parent=55 // loop_pre_header
          _
        $region79: #{cnn_encoder_forward.1} parent=55 // loop_header
          %s1878 = sphi 0, %s1882
          %p1879 = scmp.ge.s32.totalorder %s1878, 49
          %v1883 = vphi 0.0, %v1968
        $region80: #{cnn_encoder_forward.1} parent=55 // loop_header_branch
          %1881 = sbr.rel (%p1879) target = $region84
        $region81: #{cnn_encoder_forward.1} parent=55 // loop_body
          %s1884 = scalar_lea.vmem [#allocation4], %s1878
          %v1885 = vld [vmem:[%s1884] sm:$0x1]
          %v1886 = vpack.c.bf16 %v1885, %v1885
          %s1887 = smul.u32 %s1878, 64
          %s1888 = sshra.s32 %s1887, 3
          %s1889 = sand.u32 %s1887, 7
          %s1890 = smul.addr %s1888, 4
          %s1891 = scalar_lea.vmem %s7, %s1890
          %v1892 = vld [vmem:[%s1891] sm:$0xf]
          %v1893 = vld [vmem:[%s1891 + $0x4] sm:$0xf]
          %v1894 = vld [vmem:[%s1891 + $0x8] sm:$0xf]
          %v1895 = vld [vmem:[%s1891 + $0xc] sm:$0xf]
          %v1896 = vld [vmem:[%s1891 + $0x10] sm:$0xf]
          %v1897 = vld [vmem:[%s1891 + $0x14] sm:$0xf]
          %v1898 = vld [vmem:[%s1891 + $0x18] sm:$0xf]
          %v1899 = vld [vmem:[%s1891 + $0x1c] sm:$0xf]
          %v1908 = vunpack.c.l.b16 %v1892
          %v1909 = vunpack.c.l.b16 %v1893
          %v1910 = vunpack.c.l.b16 %v1894
          %v1911 = vunpack.c.l.b16 %v1895
          %v1912 = vunpack.c.l.b16 %v1896
          %v1913 = vunpack.c.l.b16 %v1897
          %v1914 = vunpack.c.l.b16 %v1898
          %v1915 = vunpack.c.l.b16 %v1899
          %v1916 = vpack.c.b16 %v1909, %v1908
          %v1917 = vpack.c.b16 %v1911, %v1910
          %v1918 = vpack.c.b16 %v1913, %v1912
          %v1919 = vpack.c.b16 %v1915, %v1914
          %vm1924 = vcmask 523264
          %v1926 = vsel %vm1924, %v1886, 0
          %1928 = vmatprep.subr.bf16.mxu0 0
          %1929 = vmatpush1.bf16.msra.mxu0 0
          %1930 = vmatprep.subr.bf16.mxu0 0
          %1931 = vmatpush1.bf16.msra.mxu0 0
          %1932 = vmatprep.subr.bf16.mxu0 0
          %1933 = vmatpush1.bf16.msra.mxu0 0
          %1934 = vmatprep.subr.bf16.mxu0 0
          %1935 = vmatpush1.bf16.msra.mxu0 0
          %1936 = vmatprep.subr.bf16.mxu0 0
          %1937 = vmatpush1.bf16.msra.mxu0 %v1919
          %1938 = vmatprep.subr.bf16.mxu0 0
          %1939 = vmatpush1.bf16.msra.mxu0 %v1918
          %1940 = vmatprep.subr.bf16.mxu0 0
          %1941 = vmatpush1.bf16.msra.mxu0 %v1917
          %1942 = vmatprep.subr.bf16.mxu0 0
          %1943 = vmatpush1.bf16.msra.mxu0 %v1916
          %1944 = vmatprep.subr.bf16.mxu0 0
          %1945 = vmatpush2.bf16.msra.mxu0 0
          %1946 = vmatprep.subr.bf16.mxu0 0
          %1947 = vmatpush2.bf16.msra.mxu0 0
          %1948 = vmatprep.subr.bf16.mxu0 0
          %1949 = vmatpush2.bf16.msra.mxu0 0
          %1950 = vmatprep.subr.bf16.mxu0 0
          %1951 = vmatpush2.bf16.msra.mxu0 0
          %1952 = vmatprep.subr.bf16.mxu0 0
          %1953 = vmatpush2.bf16.msra.mxu0 0
          %1954 = vmatprep.subr.bf16.mxu0 0
          %1955 = vmatpush2.bf16.msra.mxu0 0
          %1956 = vmatprep.subr.bf16.mxu0 0
          %1957 = vmatpush2.bf16.msra.mxu0 0
          %1958 = vmatprep.subr.bf16.mxu0 0
          %1959 = vmatpush2.bf16.msra.mxu0 0
          %1960 = vmatprep.mubr.bf16.mxu0 0
          %1961 = vmatmul.mubr.bf16.gmra.mxu0 %v1926
          %v1962 = vpop.f32.mrf.mxu0
          %v1963 = vadd.f32 0.0, %v1962
          %v1964 = vpop.f32.mrf.mxu0
          %v1965 = vpop.f32.mrf.mxu0
          %v1966 = vpop.f32.mrf.mxu0
          %1967 = vdwg.mxu0
          %v1968 = vadd.f32 %v1883, %v1963
        $region82: #{cnn_encoder_forward.1} parent=55 // loop_footer
          %s1882 = sadd.s32 1, %s1878
        $region83: #{cnn_encoder_forward.1} parent=55 // loop_footer_branch
          %1877 = sbr.rel target = $region79
        $region84: #{cnn_encoder_forward.1} parent=55 // loop_exit
          _
        %v1969 = vld [vmem:[%s8] sm:$0x1]
        %v1970 = vadd.f32 %v1883, %v1969
        %v1971 = vmax.f32 %v1970, 0.0
        %1972 = vst [vmem:[%s324] sm:$0x1] %v1971
        %s1973 = sand.u32 %s225, 1
        %s1974 = scalar_lea.sflag [#allocation6], %s1973
        %s1975 = sand.u32 %s225, 1
        %s1976 = scalar_lea.vmem [#allocation5], %s1975
        // Predicated region
        $region85: #{cnn_encoder_forward.1} parent=55 // pred_check
          %p1977 = pneg %p235
        $region86: #{cnn_encoder_forward.1} parent=55 // pred_check_branch
          %1979 = sbr.rel (%p1977) target = $region88
        $region87: #{cnn_encoder_forward.1} parent=55 // pred_region
          %s1981 = ssub.s32 16, 16
          %1982 = vsyncadd %s1974, %s1981
          %s1983 = smul.addr %s23, 16
          %s1984 = scalar_lea.hbm %s9, %s1983
          %s1986 = sshll.u32 %s1976, 4
          %s1987 = int_to_ptr.vmem [resolvable:$true] %s1986
          %1989 = dma.vmem_to_hbm [thread:$0]  %s1987, 16, %s1984, %s1974
        $region88: #{cnn_encoder_forward.1} parent=55 // pred_fallthru
          _
      $region56: #{cnn_encoder_forward.1} parent=5 // pred_fallthru
        _
      %p1990 = scmp.le.s32.totalorder 2, %s18
      // Predicated region
      $region89: #{cnn_encoder_forward.1} parent=5 // pred_check
        %p1991 = pneg %p1990
      $region90: #{cnn_encoder_forward.1} parent=5 // pred_check_branch
        %1993 = sbr.rel (%p1991) target = $region92
      $region91: #{cnn_encoder_forward.1} parent=5 // pred_region
        %s1994 = ssub.s32 %s18, 2
        // Predicated region
        $region93: #{cnn_encoder_forward.1} parent=91 // pred_check
          %p1995 = pneg %p241
        $region94: #{cnn_encoder_forward.1} parent=91 // pred_check_branch
          %1997 = sbr.rel (%p1995) target = $region96
        $region95: #{cnn_encoder_forward.1} parent=91 // pred_region
          %s1998 = sand.u32 %s226, 1
          %s1999 = scalar_lea.sflag [#allocation6], %s1998
          %s2000 = sand.u32 %s226, 1
          %s2001 = scalar_lea.vmem [#allocation5], %s2000
          %2002 = dma.done %s1999, 16
        $region96: #{cnn_encoder_forward.1} parent=91 // pred_fallthru
          _
      $region92: #{cnn_encoder_forward.1} parent=5 // pred_fallthru
        _
    $region6: #{cnn_encoder_forward.1} parent=1 // loop_footer
      %s22 = sadd.s32 1, %s18
    $region7: #{cnn_encoder_forward.1} parent=1 // loop_footer_branch
      %17 = sbr.rel target = $region3
    $region8: #{cnn_encoder_forward.1} parent=1 // loop_exit
      _
    %2003 = vsyncpa [#allocation6], 1
    %s2004 = scalar_lea.sflag [#allocation6], 1
    %2005 = vsyncpa %s2004, 1

</llo_original>
